<compile_context>
chip_gen: v7x
topology: tpu7x:2x2x1
jax: 0.10.0
libtpu: 0.0.40
codegen_flags: <defaults>
</compile_context>

<pallas_src>
import jax
import jax.numpy as jnp
from jax import lax
from jax.experimental import pallas as pl
from jax.experimental.pallas import tpu as pltpu

LANE = 128  # per-gate lane padding: gate k occupies lanes [k*LANE, k*LANE + H)


def lstm_fc_kernel(x_ref, w_ih_ref, w_hh_ref, b_ref, w_fc_ref, b_fc_ref, out_ref):
    # x_ref:    (T, BP, 1)      time-major input (I == 1), batch padded to 8
    # w_ih_ref: (1, 4*LANE)     input->gate row, gate order [i, f, o, g], lane-padded
    # w_hh_ref: (LANE, 4*LANE)  fused hidden->gate weights (bf16, rows >= H are zero)
    # b_ref:    (1, 4*LANE)     b_ih + b_hh, gate order [i, f, o, g], lane-padded
    # w_fc_ref: (1, LANE)       fc weight row (lanes >= H are zero)
    # b_fc_ref: (1, 1)          scalar in SMEM
    # out_ref:  (BP, 1)
    T, BP, _ = x_ref.shape
    HP, G = w_hh_ref.shape  # HP == LANE, G == 4*LANE

    w_hh = w_hh_ref[...]                                    # bf16, loop-invariant RHS
    # Hoist the loop-invariant broadcasts (JAX does not CSE broadcast_in_dim).
    w_ih_bc = jnp.broadcast_to(w_ih_ref[...], (BP, G))      # (BP, G) f32
    b_bc = jnp.broadcast_to(b_ref[...], (BP, G))            # (BP, G) f32

    h = jnp.zeros((BP, HP), jnp.float32)
    c = jnp.zeros((BP, HP), jnp.float32)

    # Fully unrolled recurrence (T small & static): one fused MXU matmul per
    # step; gate slices are 128-lane aligned.
    for t in range(T):
        # Rank-1 x-path computed per step (off the h-critical path, ~1-2 bundles).
        x_proj_t = x_ref[t] * w_ih_bc + b_bc                 # (BP, G)
        z = x_proj_t + jnp.dot(h.astype(jnp.bfloat16), w_hh,
                               preferred_element_type=jnp.float32)  # (BP, G) f32
        # Gate order [i, f, o | g]: one sigmoid (tanh identity -> single EUP op)
        # over the three sigmoid gates, one tanh over g.
        sig = 0.5 * jnp.tanh(0.5 * z[:, : 3 * HP]) + 0.5
        i_g = sig[:, 0 * HP:1 * HP]
        f_g = sig[:, 1 * HP:2 * HP]
        o_g = sig[:, 2 * HP:3 * HP]
        g_g = jnp.tanh(z[:, 3 * HP:])
        c = f_g * c + i_g * g_g
        h = o_g * jnp.tanh(c)
        # Padded lanes [H, HP): weights/biases are zero there so z == 0; the
        # sigmoid gates are 0.5 but g = tanh(0) = 0 keeps c == 0 and
        # tanh(c) == 0 keeps h == 0, so padding never leaks into h @ W_hh or
        # the fc reduction. Re-check this invariant if activations/padding change.

    # FC tail on VPU/XLU: broadcast-mul + lane reduce (no MXU push for N == 1).
    out_ref[...] = (
        jnp.sum(h * w_fc_ref[...], axis=-1, keepdims=True) + b_fc_ref[0, 0]
    )


def prepare_lstm_params(params):
    """One-time re-layout of PyTorch-style params into the fused, lane-padded,
    gate-reordered tensors the kernel consumes. Call once and reuse — this is
    several XLA pad/scatter/transpose ops and must stay off the forward path."""
    w_ih, w_hh, b_ih, b_hh, w_fc, b_fc = params
    H = w_hh.shape[1]
    I = w_ih.shape[1]
    assert I == 1, "kernel specializes the x-path for input_size == 1"
    assert H <= LANE

    HP, G = LANE, 4 * LANE
    f32 = jnp.float32
    # PyTorch gate order is [i, f, g, o]; kernel uses [i, f, o, g] so the three
    # sigmoid gates are lane-contiguous.
    perm = jnp.array([0, 1, 3, 2])

    w_ih_g = w_ih.reshape(4, H, I)[:, :, 0][perm].astype(f32)              # (4, H)
    w_ih_pad = jnp.zeros((4, LANE), f32).at[:, :H].set(w_ih_g).reshape(1, G)

    b_g = (b_ih + b_hh).reshape(4, H)[perm].astype(f32)                    # (4, H)
    b_pad = jnp.zeros((4, LANE), f32).at[:, :H].set(b_g).reshape(1, G)

    w_hh_g = w_hh.reshape(4, H, H)[perm]                                   # (gate, out, in)
    w_hh_g = jnp.transpose(w_hh_g, (2, 0, 1)).astype(f32)                  # (in, gate, out)
    w_hh_pad = (
        jnp.zeros((HP, 4, LANE), f32).at[:H, :, :H].set(w_hh_g)
        .reshape(HP, G).astype(jnp.bfloat16)                               # bf16 MXU RHS
    )

    w_fc_pad = jnp.zeros((1, HP), f32).at[0, :H].set(w_fc[0].astype(f32))  # (1, HP)
    b_fc_2d = b_fc.reshape(1, 1).astype(f32)                               # SMEM scalar

    return (w_ih_pad, w_hh_pad, b_pad, w_fc_pad, b_fc_2d)


def lstm_model_forward(x, prepped):
    """x: (B, T, 1) batch_first (PyTorch convention). Returns (B, 1)."""
    w_ih_pad, w_hh_pad, b_pad, w_fc_pad, b_fc_2d = prepped
    B, T, I = x.shape
    HP, G = w_hh_pad.shape
    f32 = jnp.float32

    # Pad batch to a full 8-sublane tile: the MXU LHS push is (8, 128) anyway,
    # so B <= 8 costs the same as B == 8.
    BP = max(8, ((B + 7) // 8) * 8)
    x_tm = jnp.transpose(x, (1, 0, 2)).astype(f32)                         # (T, B, 1)
    if BP != B:
        x_tm = jnp.pad(x_tm, ((0, 0), (0, BP - B), (0, 0)))

    out = pl.pallas_call(
        lstm_fc_kernel,
        out_shape=jax.ShapeDtypeStruct((BP, 1), f32),
        in_specs=[
            pl.BlockSpec(memory_space=pltpu.MemorySpace.VMEM),   # x  (T, BP, 1)
            pl.BlockSpec(memory_space=pltpu.MemorySpace.VMEM),   # w_ih (1, G)
            pl.BlockSpec(memory_space=pltpu.MemorySpace.VMEM),   # w_hh (HP, G) bf16
            pl.BlockSpec(memory_space=pltpu.MemorySpace.VMEM),   # b   (1, G)
            pl.BlockSpec(memory_space=pltpu.MemorySpace.VMEM),   # w_fc (1, HP)
            pl.BlockSpec(memory_space=pltpu.MemorySpace.SMEM),   # b_fc (1, 1)
        ],
        out_specs=pl.BlockSpec(memory_space=pltpu.MemorySpace.VMEM),
    )(x_tm, w_ih_pad, w_hh_pad, b_pad, w_fc_pad, b_fc_2d)
    return out[:B]


def lstm_model_reference(x, params):
    """Pure-JAX reference reproducing PyTorch nn.LSTM + Linear semantics (f32)."""
    w_ih, w_hh, b_ih, b_hh, w_fc, b_fc = params
    B, T, I = x.shape
    H = w_hh.shape[1]

    def step(carry, xt):
        h, c = carry
        z = xt @ w_ih.T + b_ih + h @ w_hh.T + b_hh  # (B, 4H), gate order [i,f,g,o]
        i_g = jax.nn.sigmoid(z[:, 0 * H:1 * H])
        f_g = jax.nn.sigmoid(z[:, 1 * H:2 * H])
        g_g = jnp.tanh(z[:, 2 * H:3 * H])
        o_g = jax.nn.sigmoid(z[:, 3 * H:4 * H])
        c_new = f_g * c + i_g * g_g
        h_new = o_g * jnp.tanh(c_new)
        return (h_new, c_new), h_new

    h0 = jnp.zeros((B, H), jnp.float32)
    c0 = jnp.zeros((B, H), jnp.float32)
    (h_final, _), _ = lax.scan(step, (h0, c0), jnp.transpose(x, (1, 0, 2)))
    return h_final @ w_fc.T + b_fc


def init_params(key, input_size=1, hidden_size=50):
    """Deterministic init matching PyTorch LSTM/Linear param shapes."""
    H, I = hidden_size, input_size
    k = 1.0 / jnp.sqrt(jnp.float32(H))
    keys = jax.random.split(key, 6)
    w_ih = jax.random.uniform(keys[0], (4 * H, I), jnp.float32, -k, k)
    w_hh = jax.random.uniform(keys[1], (4 * H, H), jnp.float32, -k, k)
    b_ih = jax.random.uniform(keys[2], (4 * H,), jnp.float32, -k, k)
    b_hh = jax.random.uniform(keys[3], (4 * H,), jnp.float32, -k, k)
    w_fc = jax.random.uniform(keys[4], (1, H), jnp.float32, -k, k)
    b_fc = jax.random.uniform(keys[5], (1,), jnp.float32, -k, k)
    return (w_ih, w_hh, b_ih, b_hh, w_fc, b_fc)


if __name__ == "__main__":
    B, T, I, H = 2, 8, 1, 50

    key = jax.random.PRNGKey(0)
    k_x, k_p = jax.random.split(key)
    x = jax.random.normal(k_x, (B, T, I), jnp.float32)
    params = init_params(k_p, input_size=I, hidden_size=H)

    # One-time parameter re-layout (hoisted out of the forward path).
    prepped = jax.block_until_ready(prepare_lstm_params(params))

    out = jax.block_until_ready(lstm_model_forward(x, prepped))
    ref = jax.block_until_ready(lstm_model_reference(x, params))

    assert out.shape == (B, 1), out.shape
    # bf16 MXU operands loosen numerics vs. the pure-f32 reference.
    assert jnp.allclose(out, ref, atol=2e-2, rtol=2e-2), (out, ref)

    print("KERNEL_OK")
</pallas_src>

<mosaic_0001>
module attributes {stable_mosaic.version = 11 : i64} {
  func.func @lstm_fc_kernel(%arg0: memref<8x8x1xf32, #tpu.memory_space<vmem>>, %arg1: memref<1x512xf32, #tpu.memory_space<vmem>>, %arg2: memref<128x512xbf16, #tpu.memory_space<vmem>>, %arg3: memref<1x512xf32, #tpu.memory_space<vmem>>, %arg4: memref<1x128xf32, #tpu.memory_space<vmem>>, %arg5: memref<1x1xf32, #tpu.memory_space<smem>>, %arg6: memref<8x1xf32, #tpu.memory_space<vmem>>) attributes {dimension_semantics = [], scalar_prefetch = 0 : i64, scratch_operands = 0 : i64, tpu.core_type = #tpu.core_type<tc>} {
    %c0 = arith.constant 0 : index
    %c0_0 = arith.constant 0 : index
    %0 = vector.load %arg2[%c0, %c0_0] : memref<128x512xbf16, #tpu.memory_space<vmem>>, vector<128x512xbf16>
    %c0_1 = arith.constant 0 : index
    %c0_2 = arith.constant 0 : index
    %1 = vector.load %arg1[%c0_1, %c0_2] : memref<1x512xf32, #tpu.memory_space<vmem>>, vector<1x512xf32>
    %2 = vector.shape_cast %1 : vector<1x512xf32> to vector<1x512xf32>
    %3 = vector.broadcast %2 : vector<1x512xf32> to vector<8x512xf32>
    %c0_3 = arith.constant 0 : index
    %c0_4 = arith.constant 0 : index
    %4 = vector.load %arg3[%c0_3, %c0_4] : memref<1x512xf32, #tpu.memory_space<vmem>>, vector<1x512xf32>
    %5 = vector.shape_cast %4 : vector<1x512xf32> to vector<1x512xf32>
    %6 = vector.broadcast %5 : vector<1x512xf32> to vector<8x512xf32>
    %cst = arith.constant 0.000000e+00 : f32
    %7 = vector.broadcast %cst : f32 to vector<8x128xf32>
    %cst_5 = arith.constant 0.000000e+00 : f32
    %8 = vector.broadcast %cst_5 : f32 to vector<8x128xf32>
    %c0_6 = arith.constant 0 : index
    %c0_7 = arith.constant 0 : index
    %c0_8 = arith.constant 0 : index
    %9 = vector.load %arg0[%c0_6, %c0_7, %c0_8] : memref<8x8x1xf32, #tpu.memory_space<vmem>>, vector<1x8x1xf32>
    %10 = vector.shape_cast %9 : vector<1x8x1xf32> to vector<8x1xf32>
    %11 = vector.broadcast %10 : vector<8x1xf32> to vector<8x512xf32>
    %12 = arith.mulf %11, %3 : vector<8x512xf32>
    %13 = arith.addf %12, %6 : vector<8x512xf32>
    %14 = arith.truncf %7 : vector<8x128xf32> to vector<8x128xbf16>
    %cst_9 = arith.constant dense<0.000000e+00> : vector<8x512xf32>
    %15 = tpu.matmul %14, %0, %cst_9 {dimension_numbers = #tpu.dot_dimension_numbers<[1], [0], [0], [1], [0, 0, 1, 1], [], []>} : vector<8x128xbf16>, vector<128x512xbf16>, vector<8x512xf32> -> vector<8x512xf32>
    %16 = arith.addf %13, %15 : vector<8x512xf32>
    %17 = vector.extract_strided_slice %16 {offsets = [0, 0], sizes = [8, 384], strides = [1, 1]} : vector<8x512xf32> to vector<8x384xf32>
    %cst_10 = arith.constant 5.000000e-01 : f32
    %18 = vector.broadcast %cst_10 : f32 to vector<8x384xf32>
    %19 = arith.mulf %18, %17 : vector<8x384xf32>
    %20 = math.tanh %19 : vector<8x384xf32>
    %cst_11 = arith.constant 5.000000e-01 : f32
    %21 = vector.broadcast %cst_11 : f32 to vector<8x384xf32>
    %22 = arith.mulf %21, %20 : vector<8x384xf32>
    %cst_12 = arith.constant 5.000000e-01 : f32
    %23 = vector.broadcast %cst_12 : f32 to vector<8x384xf32>
    %24 = arith.addf %22, %23 : vector<8x384xf32>
    %25 = vector.extract_strided_slice %24 {offsets = [0, 0], sizes = [8, 128], strides = [1, 1]} : vector<8x384xf32> to vector<8x128xf32>
    %26 = vector.extract_strided_slice %24 {offsets = [0, 128], sizes = [8, 128], strides = [1, 1]} : vector<8x384xf32> to vector<8x128xf32>
    %27 = vector.extract_strided_slice %24 {offsets = [0, 256], sizes = [8, 128], strides = [1, 1]} : vector<8x384xf32> to vector<8x128xf32>
    %28 = vector.extract_strided_slice %16 {offsets = [0, 384], sizes = [8, 128], strides = [1, 1]} : vector<8x512xf32> to vector<8x128xf32>
    %29 = math.tanh %28 : vector<8x128xf32>
    %30 = arith.mulf %26, %8 : vector<8x128xf32>
    %31 = arith.mulf %25, %29 : vector<8x128xf32>
    %32 = arith.addf %30, %31 : vector<8x128xf32>
    %33 = math.tanh %32 : vector<8x128xf32>
    %34 = arith.mulf %27, %33 : vector<8x128xf32>
    %c1 = arith.constant 1 : index
    %c0_13 = arith.constant 0 : index
    %c0_14 = arith.constant 0 : index
    %35 = vector.load %arg0[%c1, %c0_13, %c0_14] : memref<8x8x1xf32, #tpu.memory_space<vmem>>, vector<1x8x1xf32>
    %36 = vector.shape_cast %35 : vector<1x8x1xf32> to vector<8x1xf32>
    %37 = vector.broadcast %36 : vector<8x1xf32> to vector<8x512xf32>
    %38 = arith.mulf %37, %3 : vector<8x512xf32>
    %39 = arith.addf %38, %6 : vector<8x512xf32>
    %40 = arith.truncf %34 : vector<8x128xf32> to vector<8x128xbf16>
    %cst_15 = arith.constant dense<0.000000e+00> : vector<8x512xf32>
    %41 = tpu.matmul %40, %0, %cst_15 {dimension_numbers = #tpu.dot_dimension_numbers<[1], [0], [0], [1], [0, 0, 1, 1], [], []>} : vector<8x128xbf16>, vector<128x512xbf16>, vector<8x512xf32> -> vector<8x512xf32>
    %42 = arith.addf %39, %41 : vector<8x512xf32>
    %43 = vector.extract_strided_slice %42 {offsets = [0, 0], sizes = [8, 384], strides = [1, 1]} : vector<8x512xf32> to vector<8x384xf32>
    %cst_16 = arith.constant 5.000000e-01 : f32
    %44 = vector.broadcast %cst_16 : f32 to vector<8x384xf32>
    %45 = arith.mulf %44, %43 : vector<8x384xf32>
    %46 = math.tanh %45 : vector<8x384xf32>
    %cst_17 = arith.constant 5.000000e-01 : f32
    %47 = vector.broadcast %cst_17 : f32 to vector<8x384xf32>
    %48 = arith.mulf %47, %46 : vector<8x384xf32>
    %cst_18 = arith.constant 5.000000e-01 : f32
    %49 = vector.broadcast %cst_18 : f32 to vector<8x384xf32>
    %50 = arith.addf %48, %49 : vector<8x384xf32>
    %51 = vector.extract_strided_slice %50 {offsets = [0, 0], sizes = [8, 128], strides = [1, 1]} : vector<8x384xf32> to vector<8x128xf32>
    %52 = vector.extract_strided_slice %50 {offsets = [0, 128], sizes = [8, 128], strides = [1, 1]} : vector<8x384xf32> to vector<8x128xf32>
    %53 = vector.extract_strided_slice %50 {offsets = [0, 256], sizes = [8, 128], strides = [1, 1]} : vector<8x384xf32> to vector<8x128xf32>
    %54 = vector.extract_strided_slice %42 {offsets = [0, 384], sizes = [8, 128], strides = [1, 1]} : vector<8x512xf32> to vector<8x128xf32>
    %55 = math.tanh %54 : vector<8x128xf32>
    %56 = arith.mulf %52, %32 : vector<8x128xf32>
    %57 = arith.mulf %51, %55 : vector<8x128xf32>
    %58 = arith.addf %56, %57 : vector<8x128xf32>
    %59 = math.tanh %58 : vector<8x128xf32>
    %60 = arith.mulf %53, %59 : vector<8x128xf32>
    %c2 = arith.constant 2 : index
    %c0_19 = arith.constant 0 : index
    %c0_20 = arith.constant 0 : index
    %61 = vector.load %arg0[%c2, %c0_19, %c0_20] : memref<8x8x1xf32, #tpu.memory_space<vmem>>, vector<1x8x1xf32>
    %62 = vector.shape_cast %61 : vector<1x8x1xf32> to vector<8x1xf32>
    %63 = vector.broadcast %62 : vector<8x1xf32> to vector<8x512xf32>
    %64 = arith.mulf %63, %3 : vector<8x512xf32>
    %65 = arith.addf %64, %6 : vector<8x512xf32>
    %66 = arith.truncf %60 : vector<8x128xf32> to vector<8x128xbf16>
    %cst_21 = arith.constant dense<0.000000e+00> : vector<8x512xf32>
    %67 = tpu.matmul %66, %0, %cst_21 {dimension_numbers = #tpu.dot_dimension_numbers<[1], [0], [0], [1], [0, 0, 1, 1], [], []>} : vector<8x128xbf16>, vector<128x512xbf16>, vector<8x512xf32> -> vector<8x512xf32>
    %68 = arith.addf %65, %67 : vector<8x512xf32>
    %69 = vector.extract_strided_slice %68 {offsets = [0, 0], sizes = [8, 384], strides = [1, 1]} : vector<8x512xf32> to vector<8x384xf32>
    %cst_22 = arith.constant 5.000000e-01 : f32
    %70 = vector.broadcast %cst_22 : f32 to vector<8x384xf32>
    %71 = arith.mulf %70, %69 : vector<8x384xf32>
    %72 = math.tanh %71 : vector<8x384xf32>
    %cst_23 = arith.constant 5.000000e-01 : f32
    %73 = vector.broadcast %cst_23 : f32 to vector<8x384xf32>
    %74 = arith.mulf %73, %72 : vector<8x384xf32>
    %cst_24 = arith.constant 5.000000e-01 : f32
    %75 = vector.broadcast %cst_24 : f32 to vector<8x384xf32>
    %76 = arith.addf %74, %75 : vector<8x384xf32>
    %77 = vector.extract_strided_slice %76 {offsets = [0, 0], sizes = [8, 128], strides = [1, 1]} : vector<8x384xf32> to vector<8x128xf32>
    %78 = vector.extract_strided_slice %76 {offsets = [0, 128], sizes = [8, 128], strides = [1, 1]} : vector<8x384xf32> to vector<8x128xf32>
    %79 = vector.extract_strided_slice %76 {offsets = [0, 256], sizes = [8, 128], strides = [1, 1]} : vector<8x384xf32> to vector<8x128xf32>
    %80 = vector.extract_strided_slice %68 {offsets = [0, 384], sizes = [8, 128], strides = [1, 1]} : vector<8x512xf32> to vector<8x128xf32>
    %81 = math.tanh %80 : vector<8x128xf32>
    %82 = arith.mulf %78, %58 : vector<8x128xf32>
    %83 = arith.mulf %77, %81 : vector<8x128xf32>
    %84 = arith.addf %82, %83 : vector<8x128xf32>
    %85 = math.tanh %84 : vector<8x128xf32>
    %86 = arith.mulf %79, %85 : vector<8x128xf32>
    %c3 = arith.constant 3 : index
    %c0_25 = arith.constant 0 : index
    %c0_26 = arith.constant 0 : index
    %87 = vector.load %arg0[%c3, %c0_25, %c0_26] : memref<8x8x1xf32, #tpu.memory_space<vmem>>, vector<1x8x1xf32>
    %88 = vector.shape_cast %87 : vector<1x8x1xf32> to vector<8x1xf32>
    %89 = vector.broadcast %88 : vector<8x1xf32> to vector<8x512xf32>
    %90 = arith.mulf %89, %3 : vector<8x512xf32>
    %91 = arith.addf %90, %6 : vector<8x512xf32>
    %92 = arith.truncf %86 : vector<8x128xf32> to vector<8x128xbf16>
    %cst_27 = arith.constant dense<0.000000e+00> : vector<8x512xf32>
    %93 = tpu.matmul %92, %0, %cst_27 {dimension_numbers = #tpu.dot_dimension_numbers<[1], [0], [0], [1], [0, 0, 1, 1], [], []>} : vector<8x128xbf16>, vector<128x512xbf16>, vector<8x512xf32> -> vector<8x512xf32>
    %94 = arith.addf %91, %93 : vector<8x512xf32>
    %95 = vector.extract_strided_slice %94 {offsets = [0, 0], sizes = [8, 384], strides = [1, 1]} : vector<8x512xf32> to vector<8x384xf32>
    %cst_28 = arith.constant 5.000000e-01 : f32
    %96 = vector.broadcast %cst_28 : f32 to vector<8x384xf32>
    %97 = arith.mulf %96, %95 : vector<8x384xf32>
    %98 = math.tanh %97 : vector<8x384xf32>
    %cst_29 = arith.constant 5.000000e-01 : f32
    %99 = vector.broadcast %cst_29 : f32 to vector<8x384xf32>
    %100 = arith.mulf %99, %98 : vector<8x384xf32>
    %cst_30 = arith.constant 5.000000e-01 : f32
    %101 = vector.broadcast %cst_30 : f32 to vector<8x384xf32>
    %102 = arith.addf %100, %101 : vector<8x384xf32>
    %103 = vector.extract_strided_slice %102 {offsets = [0, 0], sizes = [8, 128], strides = [1, 1]} : vector<8x384xf32> to vector<8x128xf32>
    %104 = vector.extract_strided_slice %102 {offsets = [0, 128], sizes = [8, 128], strides = [1, 1]} : vector<8x384xf32> to vector<8x128xf32>
    %105 = vector.extract_strided_slice %102 {offsets = [0, 256], sizes = [8, 128], strides = [1, 1]} : vector<8x384xf32> to vector<8x128xf32>
    %106 = vector.extract_strided_slice %94 {offsets = [0, 384], sizes = [8, 128], strides = [1, 1]} : vector<8x512xf32> to vector<8x128xf32>
    %107 = math.tanh %106 : vector<8x128xf32>
    %108 = arith.mulf %104, %84 : vector<8x128xf32>
    %109 = arith.mulf %103, %107 : vector<8x128xf32>
    %110 = arith.addf %108, %109 : vector<8x128xf32>
    %111 = math.tanh %110 : vector<8x128xf32>
    %112 = arith.mulf %105, %111 : vector<8x128xf32>
    %c4 = arith.constant 4 : index
    %c0_31 = arith.constant 0 : index
    %c0_32 = arith.constant 0 : index
    %113 = vector.load %arg0[%c4, %c0_31, %c0_32] : memref<8x8x1xf32, #tpu.memory_space<vmem>>, vector<1x8x1xf32>
    %114 = vector.shape_cast %113 : vector<1x8x1xf32> to vector<8x1xf32>
    %115 = vector.broadcast %114 : vector<8x1xf32> to vector<8x512xf32>
    %116 = arith.mulf %115, %3 : vector<8x512xf32>
    %117 = arith.addf %116, %6 : vector<8x512xf32>
    %118 = arith.truncf %112 : vector<8x128xf32> to vector<8x128xbf16>
    %cst_33 = arith.constant dense<0.000000e+00> : vector<8x512xf32>
    %119 = tpu.matmul %118, %0, %cst_33 {dimension_numbers = #tpu.dot_dimension_numbers<[1], [0], [0], [1], [0, 0, 1, 1], [], []>} : vector<8x128xbf16>, vector<128x512xbf16>, vector<8x512xf32> -> vector<8x512xf32>
    %120 = arith.addf %117, %119 : vector<8x512xf32>
    %121 = vector.extract_strided_slice %120 {offsets = [0, 0], sizes = [8, 384], strides = [1, 1]} : vector<8x512xf32> to vector<8x384xf32>
    %cst_34 = arith.constant 5.000000e-01 : f32
    %122 = vector.broadcast %cst_34 : f32 to vector<8x384xf32>
    %123 = arith.mulf %122, %121 : vector<8x384xf32>
    %124 = math.tanh %123 : vector<8x384xf32>
    %cst_35 = arith.constant 5.000000e-01 : f32
    %125 = vector.broadcast %cst_35 : f32 to vector<8x384xf32>
    %126 = arith.mulf %125, %124 : vector<8x384xf32>
    %cst_36 = arith.constant 5.000000e-01 : f32
    %127 = vector.broadcast %cst_36 : f32 to vector<8x384xf32>
    %128 = arith.addf %126, %127 : vector<8x384xf32>
    %129 = vector.extract_strided_slice %128 {offsets = [0, 0], sizes = [8, 128], strides = [1, 1]} : vector<8x384xf32> to vector<8x128xf32>
    %130 = vector.extract_strided_slice %128 {offsets = [0, 128], sizes = [8, 128], strides = [1, 1]} : vector<8x384xf32> to vector<8x128xf32>
    %131 = vector.extract_strided_slice %128 {offsets = [0, 256], sizes = [8, 128], strides = [1, 1]} : vector<8x384xf32> to vector<8x128xf32>
    %132 = vector.extract_strided_slice %120 {offsets = [0, 384], sizes = [8, 128], strides = [1, 1]} : vector<8x512xf32> to vector<8x128xf32>
    %133 = math.tanh %132 : vector<8x128xf32>
    %134 = arith.mulf %130, %110 : vector<8x128xf32>
    %135 = arith.mulf %129, %133 : vector<8x128xf32>
    %136 = arith.addf %134, %135 : vector<8x128xf32>
    %137 = math.tanh %136 : vector<8x128xf32>
    %138 = arith.mulf %131, %137 : vector<8x128xf32>
    %c5 = arith.constant 5 : index
    %c0_37 = arith.constant 0 : index
    %c0_38 = arith.constant 0 : index
    %139 = vector.load %arg0[%c5, %c0_37, %c0_38] : memref<8x8x1xf32, #tpu.memory_space<vmem>>, vector<1x8x1xf32>
    %140 = vector.shape_cast %139 : vector<1x8x1xf32> to vector<8x1xf32>
    %141 = vector.broadcast %140 : vector<8x1xf32> to vector<8x512xf32>
    %142 = arith.mulf %141, %3 : vector<8x512xf32>
    %143 = arith.addf %142, %6 : vector<8x512xf32>
    %144 = arith.truncf %138 : vector<8x128xf32> to vector<8x128xbf16>
    %cst_39 = arith.constant dense<0.000000e+00> : vector<8x512xf32>
    %145 = tpu.matmul %144, %0, %cst_39 {dimension_numbers = #tpu.dot_dimension_numbers<[1], [0], [0], [1], [0, 0, 1, 1], [], []>} : vector<8x128xbf16>, vector<128x512xbf16>, vector<8x512xf32> -> vector<8x512xf32>
    %146 = arith.addf %143, %145 : vector<8x512xf32>
    %147 = vector.extract_strided_slice %146 {offsets = [0, 0], sizes = [8, 384], strides = [1, 1]} : vector<8x512xf32> to vector<8x384xf32>
    %cst_40 = arith.constant 5.000000e-01 : f32
    %148 = vector.broadcast %cst_40 : f32 to vector<8x384xf32>
    %149 = arith.mulf %148, %147 : vector<8x384xf32>
    %150 = math.tanh %149 : vector<8x384xf32>
    %cst_41 = arith.constant 5.000000e-01 : f32
    %151 = vector.broadcast %cst_41 : f32 to vector<8x384xf32>
    %152 = arith.mulf %151, %150 : vector<8x384xf32>
    %cst_42 = arith.constant 5.000000e-01 : f32
    %153 = vector.broadcast %cst_42 : f32 to vector<8x384xf32>
    %154 = arith.addf %152, %153 : vector<8x384xf32>
    %155 = vector.extract_strided_slice %154 {offsets = [0, 0], sizes = [8, 128], strides = [1, 1]} : vector<8x384xf32> to vector<8x128xf32>
    %156 = vector.extract_strided_slice %154 {offsets = [0, 128], sizes = [8, 128], strides = [1, 1]} : vector<8x384xf32> to vector<8x128xf32>
    %157 = vector.extract_strided_slice %154 {offsets = [0, 256], sizes = [8, 128], strides = [1, 1]} : vector<8x384xf32> to vector<8x128xf32>
    %158 = vector.extract_strided_slice %146 {offsets = [0, 384], sizes = [8, 128], strides = [1, 1]} : vector<8x512xf32> to vector<8x128xf32>
    %159 = math.tanh %158 : vector<8x128xf32>
    %160 = arith.mulf %156, %136 : vector<8x128xf32>
    %161 = arith.mulf %155, %159 : vector<8x128xf32>
    %162 = arith.addf %160, %161 : vector<8x128xf32>
    %163 = math.tanh %162 : vector<8x128xf32>
    %164 = arith.mulf %157, %163 : vector<8x128xf32>
    %c6 = arith.constant 6 : index
    %c0_43 = arith.constant 0 : index
    %c0_44 = arith.constant 0 : index
    %165 = vector.load %arg0[%c6, %c0_43, %c0_44] : memref<8x8x1xf32, #tpu.memory_space<vmem>>, vector<1x8x1xf32>
    %166 = vector.shape_cast %165 : vector<1x8x1xf32> to vector<8x1xf32>
    %167 = vector.broadcast %166 : vector<8x1xf32> to vector<8x512xf32>
    %168 = arith.mulf %167, %3 : vector<8x512xf32>
    %169 = arith.addf %168, %6 : vector<8x512xf32>
    %170 = arith.truncf %164 : vector<8x128xf32> to vector<8x128xbf16>
    %cst_45 = arith.constant dense<0.000000e+00> : vector<8x512xf32>
    %171 = tpu.matmul %170, %0, %cst_45 {dimension_numbers = #tpu.dot_dimension_numbers<[1], [0], [0], [1], [0, 0, 1, 1], [], []>} : vector<8x128xbf16>, vector<128x512xbf16>, vector<8x512xf32> -> vector<8x512xf32>
    %172 = arith.addf %169, %171 : vector<8x512xf32>
    %173 = vector.extract_strided_slice %172 {offsets = [0, 0], sizes = [8, 384], strides = [1, 1]} : vector<8x512xf32> to vector<8x384xf32>
    %cst_46 = arith.constant 5.000000e-01 : f32
    %174 = vector.broadcast %cst_46 : f32 to vector<8x384xf32>
    %175 = arith.mulf %174, %173 : vector<8x384xf32>
    %176 = math.tanh %175 : vector<8x384xf32>
    %cst_47 = arith.constant 5.000000e-01 : f32
    %177 = vector.broadcast %cst_47 : f32 to vector<8x384xf32>
    %178 = arith.mulf %177, %176 : vector<8x384xf32>
    %cst_48 = arith.constant 5.000000e-01 : f32
    %179 = vector.broadcast %cst_48 : f32 to vector<8x384xf32>
    %180 = arith.addf %178, %179 : vector<8x384xf32>
    %181 = vector.extract_strided_slice %180 {offsets = [0, 0], sizes = [8, 128], strides = [1, 1]} : vector<8x384xf32> to vector<8x128xf32>
    %182 = vector.extract_strided_slice %180 {offsets = [0, 128], sizes = [8, 128], strides = [1, 1]} : vector<8x384xf32> to vector<8x128xf32>
    %183 = vector.extract_strided_slice %180 {offsets = [0, 256], sizes = [8, 128], strides = [1, 1]} : vector<8x384xf32> to vector<8x128xf32>
    %184 = vector.extract_strided_slice %172 {offsets = [0, 384], sizes = [8, 128], strides = [1, 1]} : vector<8x512xf32> to vector<8x128xf32>
    %185 = math.tanh %184 : vector<8x128xf32>
    %186 = arith.mulf %182, %162 : vector<8x128xf32>
    %187 = arith.mulf %181, %185 : vector<8x128xf32>
    %188 = arith.addf %186, %187 : vector<8x128xf32>
    %189 = math.tanh %188 : vector<8x128xf32>
    %190 = arith.mulf %183, %189 : vector<8x128xf32>
    %c7 = arith.constant 7 : index
    %c0_49 = arith.constant 0 : index
    %c0_50 = arith.constant 0 : index
    %191 = vector.load %arg0[%c7, %c0_49, %c0_50] : memref<8x8x1xf32, #tpu.memory_space<vmem>>, vector<1x8x1xf32>
    %192 = vector.shape_cast %191 : vector<1x8x1xf32> to vector<8x1xf32>
    %193 = vector.broadcast %192 : vector<8x1xf32> to vector<8x512xf32>
    %194 = arith.mulf %193, %3 : vector<8x512xf32>
    %195 = arith.addf %194, %6 : vector<8x512xf32>
    %196 = arith.truncf %190 : vector<8x128xf32> to vector<8x128xbf16>
    %cst_51 = arith.constant dense<0.000000e+00> : vector<8x512xf32>
    %197 = tpu.matmul %196, %0, %cst_51 {dimension_numbers = #tpu.dot_dimension_numbers<[1], [0], [0], [1], [0, 0, 1, 1], [], []>} : vector<8x128xbf16>, vector<128x512xbf16>, vector<8x512xf32> -> vector<8x512xf32>
    %198 = arith.addf %195, %197 : vector<8x512xf32>
    %199 = vector.extract_strided_slice %198 {offsets = [0, 0], sizes = [8, 384], strides = [1, 1]} : vector<8x512xf32> to vector<8x384xf32>
    %cst_52 = arith.constant 5.000000e-01 : f32
    %200 = vector.broadcast %cst_52 : f32 to vector<8x384xf32>
    %201 = arith.mulf %200, %199 : vector<8x384xf32>
    %202 = math.tanh %201 : vector<8x384xf32>
    %cst_53 = arith.constant 5.000000e-01 : f32
    %203 = vector.broadcast %cst_53 : f32 to vector<8x384xf32>
    %204 = arith.mulf %203, %202 : vector<8x384xf32>
    %cst_54 = arith.constant 5.000000e-01 : f32
    %205 = vector.broadcast %cst_54 : f32 to vector<8x384xf32>
    %206 = arith.addf %204, %205 : vector<8x384xf32>
    %207 = vector.extract_strided_slice %206 {offsets = [0, 0], sizes = [8, 128], strides = [1, 1]} : vector<8x384xf32> to vector<8x128xf32>
    %208 = vector.extract_strided_slice %206 {offsets = [0, 128], sizes = [8, 128], strides = [1, 1]} : vector<8x384xf32> to vector<8x128xf32>
    %209 = vector.extract_strided_slice %206 {offsets = [0, 256], sizes = [8, 128], strides = [1, 1]} : vector<8x384xf32> to vector<8x128xf32>
    %210 = vector.extract_strided_slice %198 {offsets = [0, 384], sizes = [8, 128], strides = [1, 1]} : vector<8x512xf32> to vector<8x128xf32>
    %211 = math.tanh %210 : vector<8x128xf32>
    %212 = arith.mulf %208, %188 : vector<8x128xf32>
    %213 = arith.mulf %207, %211 : vector<8x128xf32>
    %214 = arith.addf %212, %213 : vector<8x128xf32>
    %215 = math.tanh %214 : vector<8x128xf32>
    %216 = arith.mulf %209, %215 : vector<8x128xf32>
    %c0_55 = arith.constant 0 : index
    %c0_56 = arith.constant 0 : index
    %217 = vector.load %arg4[%c0_55, %c0_56] : memref<1x128xf32, #tpu.memory_space<vmem>>, vector<1x128xf32>
    %218 = vector.broadcast %217 : vector<1x128xf32> to vector<8x128xf32>
    %219 = arith.mulf %216, %218 : vector<8x128xf32>
    %cst_57 = arith.constant dense<0.000000e+00> : vector<8xf32>
    %220 = vector.multi_reduction <add>, %219, %cst_57 [1] : vector<8x128xf32> to vector<8xf32>
    %221 = vector.shape_cast %220 : vector<8xf32> to vector<8x1xf32>
    %c0_58 = arith.constant 0 : index
    %c0_59 = arith.constant 0 : index
    %222 = memref.load %arg5[%c0_58, %c0_59] : memref<1x1xf32, #tpu.memory_space<smem>>
    %223 = vector.broadcast %222 : f32 to vector<8x1xf32>
    %224 = arith.addf %221, %223 : vector<8x1xf32>
    %c0_60 = arith.constant 0 : index
    %c0_61 = arith.constant 0 : index
    %225 = vector.load %arg6[%c0_60, %c0_61] : memref<8x1xf32, #tpu.memory_space<vmem>>, vector<8x1xf32>
    tpu.vector_store %arg6[%c0_60, %c0_61], %224 {strides = array<i32>} : memref<8x1xf32, #tpu.memory_space<vmem>>, vector<8x1xf32>,
    return
  }
}

</mosaic_0001>

<llo_original>
// kernel: tpu_custom_call.1
$region0: #{tpu_custom_call.1}
  #allocation0 [shape = 'u32[]', space=smem, size = 0x4, offset = 0x4, fixed_abs, tag = 'smem constant byte address 0x4 - core index']
  #allocation1 [shape = 'u32[144,128]{1,0:T(1,128)}', space=vmem, size = 0x12000, scoped, tag = 'internal scratch']
  #allocation2 [shape = 'f32[1,1]{1,0:T(1,128)S(6)}', space=smem, size = 0x200, scoped, tag = 'scoped memory for tpu_custom_call.1']
  %s0 = inlined_call_operand.vmem [shape: f32[8,8,1], index: 0, kind: input, shape index: {}]
  %s1 = inlined_call_operand.vmem [shape: f32[1,512], index: 1, kind: input, shape index: {}]
  %s2 = inlined_call_operand.hbm [shape: bf16[128,512], index: 2, kind: input, shape index: {}]
  %s3 = inlined_call_operand.vmem [shape: f32[1,512], index: 3, kind: input, shape index: {}]
  %s4 = inlined_call_operand.vmem [shape: f32[1,128], index: 4, kind: input, shape index: {}]
  %s5 = inlined_call_operand.<no memory space> [shape: f32[1,1], index: 5, kind: input, shape index: {}]
  %s6 = inlined_call_operand.vmem [shape: f32[8,1], index: 6, kind: output, shape index: {}]
  %s7 = sld [smem:[#allocation0]]
  $region38: #{tpu_custom_call.1} parent=0
    _
  %s9 = ssub.s32 1, %s7
  %s10 = scalar_select 0, %s9, %s7
  %11 = sst [smem:[#allocation2]] %s5
  $region1: #{tpu_custom_call.1} parent=0
    #allocation3 [shape = 'u8[131072]{0}', space=vmem, size = 0x20000, scoped, tag = 'input window, operand 2, single buffered']
    #allocation4 [shape = 's32[1]{0}', space=sflag, size = 0x4, scoped, tag = 'scoped memory for tpu_custom_call.1']
    %12 = vsyncpa [#allocation4], 0
    // Predicated region
    $region2: #{tpu_custom_call.1} parent=1 // pred_check
      _
    $region3: #{tpu_custom_call.1} parent=1 // pred_check_branch
      %14 = sbr.rel (0) target = $region5
    $region4: #{tpu_custom_call.1} parent=1 // pred_region
      _
    $region5: #{tpu_custom_call.1} parent=1 // pred_fallthru
      _
    // Predicated region
    $region6: #{tpu_custom_call.1} parent=1 // pred_check
      _
    $region7: #{tpu_custom_call.1} parent=1 // pred_check_branch
      %16 = sbr.rel (0) target = $region9
    $region8: #{tpu_custom_call.1} parent=1 // pred_region
      _
    $region9: #{tpu_custom_call.1} parent=1 // pred_fallthru
      _
    // Predicated region
    $region10: #{tpu_custom_call.1} parent=1 // pred_check
      _
    $region11: #{tpu_custom_call.1} parent=1 // pred_check_branch
      %18 = sbr.rel (0) target = $region13
    $region12: #{tpu_custom_call.1} parent=1 // pred_region
      %s20 = ssub.s32 4096, 4096
      %21 = vsyncadd [#allocation4], %s20
      %s22 = sshll.u32 [#allocation3], 4
      %s23 = int_to_ptr.vmem [resolvable:$true] %s22
      %28 = dma.hbm_to_vmem [thread:$0]  %s2, 4096, %s23, [#allocation4], 256, 256, 16
    $region13: #{tpu_custom_call.1} parent=1 // pred_fallthru
      _
    // Predicated region
    $region14: #{tpu_custom_call.1} parent=1 // pred_check
      _
    $region15: #{tpu_custom_call.1} parent=1 // pred_check_branch
      %30 = sbr.rel (0) target = $region17
    $region16: #{tpu_custom_call.1} parent=1 // pred_region
      _
    $region17: #{tpu_custom_call.1} parent=1 // pred_fallthru
      _
    // Predicated region
    $region18: #{tpu_custom_call.1} parent=1 // pred_check
      _
    $region19: #{tpu_custom_call.1} parent=1 // pred_check_branch
      %32 = sbr.rel (0) target = $region21
    $region20: #{tpu_custom_call.1} parent=1 // pred_region
      _
    $region21: #{tpu_custom_call.1} parent=1 // pred_fallthru
      _
    // Predicated region
    $region22: #{tpu_custom_call.1} parent=1 // pred_check
      _
    $region23: #{tpu_custom_call.1} parent=1 // pred_check_branch
      %34 = sbr.rel (0) target = $region25
    $region24: #{tpu_custom_call.1} parent=1 // pred_region
      _
    $region25: #{tpu_custom_call.1} parent=1 // pred_fallthru
      _
    // Predicated region
    $region26: #{tpu_custom_call.1} parent=1 // pred_check
      _
    $region27: #{tpu_custom_call.1} parent=1 // pred_check_branch
      %36 = sbr.rel (0) target = $region29
    $region28: #{tpu_custom_call.1} parent=1 // pred_region
      %37 = dma.done [#allocation4], 4096
    $region29: #{tpu_custom_call.1} parent=1 // pred_fallthru
      _
    %v39 = vld [vmem:[#allocation3] sm:$0xff]
    %v40 = vld [vmem:[#allocation3 + $0x8] sm:$0xff]
    %v41 = vld [vmem:[#allocation3 + $0x10] sm:$0xff]
    %v42 = vld [vmem:[#allocation3 + $0x18] sm:$0xff]
    %v43 = vld [vmem:[#allocation3 + $0x20] sm:$0xff]
    %v44 = vld [vmem:[#allocation3 + $0x28] sm:$0xff]
    %v45 = vld [vmem:[#allocation3 + $0x30] sm:$0xff]
    %v46 = vld [vmem:[#allocation3 + $0x38] sm:$0xff]
    %v47 = vld [vmem:[#allocation3 + $0x40] sm:$0xff]
    %v48 = vld [vmem:[#allocation3 + $0x48] sm:$0xff]
    %v49 = vld [vmem:[#allocation3 + $0x50] sm:$0xff]
    %v50 = vld [vmem:[#allocation3 + $0x58] sm:$0xff]
    %v51 = vld [vmem:[#allocation3 + $0x60] sm:$0xff]
    %v52 = vld [vmem:[#allocation3 + $0x68] sm:$0xff]
    %v53 = vld [vmem:[#allocation3 + $0x70] sm:$0xff]
    %v54 = vld [vmem:[#allocation3 + $0x78] sm:$0xff]
    %v55 = vld [vmem:[#allocation3 + $0x80] sm:$0xff]
    %v56 = vld [vmem:[#allocation3 + $0x88] sm:$0xff]
    %v57 = vld [vmem:[#allocation3 + $0x90] sm:$0xff]
    %v58 = vld [vmem:[#allocation3 + $0x98] sm:$0xff]
    %v59 = vld [vmem:[#allocation3 + $0xa0] sm:$0xff]
    %v60 = vld [vmem:[#allocation3 + $0xa8] sm:$0xff]
    %v61 = vld [vmem:[#allocation3 + $0xb0] sm:$0xff]
    %v62 = vld [vmem:[#allocation3 + $0xb8] sm:$0xff]
    %v63 = vld [vmem:[#allocation3 + $0xc0] sm:$0xff]
    %v64 = vld [vmem:[#allocation3 + $0xc8] sm:$0xff]
    %v65 = vld [vmem:[#allocation3 + $0xd0] sm:$0xff]
    %v66 = vld [vmem:[#allocation3 + $0xd8] sm:$0xff]
    %v67 = vld [vmem:[#allocation3 + $0xe0] sm:$0xff]
    %v68 = vld [vmem:[#allocation3 + $0xe8] sm:$0xff]
    %v69 = vld [vmem:[#allocation3 + $0xf0] sm:$0xff]
    %v70 = vld [vmem:[#allocation3 + $0xf8] sm:$0xff]
    %v71 = vld [vmem:[%s1] sm:$0xf]
    %v73 = vlaneseq
    %v74 = vshrl.u32 %v73, 7
    %v75 = vsub.s32 0, %v74
    %v76 = vrot.slane %v71, %v75
    %v77 = vlaneseq
    %v78 = vshrl.u32 %v77, 7
    %v79 = vsub.s32 1, %v78
    %v80 = vrot.slane %v71, %v79
    %v81 = vlaneseq
    %v82 = vshrl.u32 %v81, 7
    %v83 = vsub.s32 2, %v82
    %v84 = vrot.slane %v71, %v83
    %v85 = vlaneseq
    %v86 = vshrl.u32 %v85, 7
    %v87 = vsub.s32 3, %v86
    %v88 = vrot.slane %v71, %v87
    %v93 = vld [vmem:[%s3] sm:$0xf]
    %v95 = vlaneseq
    %v96 = vshrl.u32 %v95, 7
    %v97 = vsub.s32 0, %v96
    %v98 = vrot.slane %v93, %v97
    %v99 = vlaneseq
    %v100 = vshrl.u32 %v99, 7
    %v101 = vsub.s32 1, %v100
    %v102 = vrot.slane %v93, %v101
    %v103 = vlaneseq
    %v104 = vshrl.u32 %v103, 7
    %v105 = vsub.s32 2, %v104
    %v106 = vrot.slane %v93, %v105
    %v107 = vlaneseq
    %v108 = vshrl.u32 %v107, 7
    %v109 = vsub.s32 3, %v108
    %v110 = vrot.slane %v93, %v109
    %v115 = vld [vmem:[%s0] sm:$0xff]
    %117 = vset.pattern.permute.xlu0 0
    %118 = vperm.xlu0 %117, %v115
    %v119 = vpop.permute.xlu0 %118
    %v121 = vmul.f32 %v119, %v76
    %v122 = vmul.f32 %v119, %v80
    %v123 = vmul.f32 %v119, %v84
    %v124 = vmul.f32 %v119, %v88
    %v125 = vadd.f32 %v121, %v98
    %v126 = vadd.f32 %v122, %v102
    %v127 = vadd.f32 %v123, %v106
    %v128 = vadd.f32 %v124, %v110
    %v161 = vunpack.c.l.b16 %v39
    %v162 = vunpack.c.h.b16 %v39
    %v163 = vunpack.c.l.b16 %v40
    %v164 = vunpack.c.h.b16 %v40
    %v165 = vunpack.c.l.b16 %v41
    %v166 = vunpack.c.h.b16 %v41
    %v167 = vunpack.c.l.b16 %v42
    %v168 = vunpack.c.h.b16 %v42
    %v169 = vunpack.c.l.b16 %v43
    %v170 = vunpack.c.h.b16 %v43
    %v171 = vunpack.c.l.b16 %v44
    %v172 = vunpack.c.h.b16 %v44
    %v173 = vunpack.c.l.b16 %v45
    %v174 = vunpack.c.h.b16 %v45
    %v175 = vunpack.c.l.b16 %v46
    %v176 = vunpack.c.h.b16 %v46
    %v177 = vunpack.c.l.b16 %v47
    %v178 = vunpack.c.h.b16 %v47
    %v179 = vunpack.c.l.b16 %v48
    %v180 = vunpack.c.h.b16 %v48
    %v181 = vunpack.c.l.b16 %v49
    %v182 = vunpack.c.h.b16 %v49
    %v183 = vunpack.c.l.b16 %v50
    %v184 = vunpack.c.h.b16 %v50
    %v185 = vunpack.c.l.b16 %v51
    %v186 = vunpack.c.h.b16 %v51
    %v187 = vunpack.c.l.b16 %v52
    %v188 = vunpack.c.h.b16 %v52
    %v189 = vunpack.c.l.b16 %v53
    %v190 = vunpack.c.h.b16 %v53
    %v191 = vunpack.c.l.b16 %v54
    %v192 = vunpack.c.h.b16 %v54
    %v193 = vunpack.c.l.b16 %v55
    %v194 = vunpack.c.h.b16 %v55
    %v195 = vunpack.c.l.b16 %v56
    %v196 = vunpack.c.h.b16 %v56
    %v197 = vunpack.c.l.b16 %v57
    %v198 = vunpack.c.h.b16 %v57
    %v199 = vunpack.c.l.b16 %v58
    %v200 = vunpack.c.h.b16 %v58
    %v201 = vunpack.c.l.b16 %v59
    %v202 = vunpack.c.h.b16 %v59
    %v203 = vunpack.c.l.b16 %v60
    %v204 = vunpack.c.h.b16 %v60
    %v205 = vunpack.c.l.b16 %v61
    %v206 = vunpack.c.h.b16 %v61
    %v207 = vunpack.c.l.b16 %v62
    %v208 = vunpack.c.h.b16 %v62
    %v209 = vunpack.c.l.b16 %v63
    %v210 = vunpack.c.h.b16 %v63
    %v211 = vunpack.c.l.b16 %v64
    %v212 = vunpack.c.h.b16 %v64
    %v213 = vunpack.c.l.b16 %v65
    %v214 = vunpack.c.h.b16 %v65
    %v215 = vunpack.c.l.b16 %v66
    %v216 = vunpack.c.h.b16 %v66
    %v217 = vunpack.c.l.b16 %v67
    %v218 = vunpack.c.h.b16 %v67
    %v219 = vunpack.c.l.b16 %v68
    %v220 = vunpack.c.h.b16 %v68
    %v221 = vunpack.c.l.b16 %v69
    %v222 = vunpack.c.h.b16 %v69
    %v223 = vunpack.c.l.b16 %v70
    %v224 = vunpack.c.h.b16 %v70
    %v225 = vpack.c.b16 %v165, %v161
    %v226 = vpack.c.b16 %v166, %v162
    %v227 = vpack.c.b16 %v167, %v163
    %v228 = vpack.c.b16 %v168, %v164
    %v229 = vpack.c.b16 %v173, %v169
    %v230 = vpack.c.b16 %v174, %v170
    %v231 = vpack.c.b16 %v175, %v171
    %v232 = vpack.c.b16 %v176, %v172
    %v233 = vpack.c.b16 %v181, %v177
    %v234 = vpack.c.b16 %v182, %v178
    %v235 = vpack.c.b16 %v183, %v179
    %v236 = vpack.c.b16 %v184, %v180
    %v237 = vpack.c.b16 %v189, %v185
    %v238 = vpack.c.b16 %v190, %v186
    %v239 = vpack.c.b16 %v191, %v187
    %v240 = vpack.c.b16 %v192, %v188
    %v241 = vpack.c.b16 %v197, %v193
    %v242 = vpack.c.b16 %v198, %v194
    %v243 = vpack.c.b16 %v199, %v195
    %v244 = vpack.c.b16 %v200, %v196
    %v245 = vpack.c.b16 %v205, %v201
    %v246 = vpack.c.b16 %v206, %v202
    %v247 = vpack.c.b16 %v207, %v203
    %v248 = vpack.c.b16 %v208, %v204
    %v249 = vpack.c.b16 %v213, %v209
    %v250 = vpack.c.b16 %v214, %v210
    %v251 = vpack.c.b16 %v215, %v211
    %v252 = vpack.c.b16 %v216, %v212
    %v253 = vpack.c.b16 %v221, %v217
    %v254 = vpack.c.b16 %v222, %v218
    %v255 = vpack.c.b16 %v223, %v219
    %v256 = vpack.c.b16 %v224, %v220
    %289 = vmatprep.subr.bf16.mxu0 %v226
    %290 = vmatpush1.bf16.msra.mxu0 %v225
    %291 = vmatprep.subr.bf16.mxu0 %v230
    %292 = vmatpush1.bf16.msra.mxu0 %v229
    %293 = vmatprep.subr.bf16.mxu0 %v234
    %294 = vmatpush1.bf16.msra.mxu0 %v233
    %295 = vmatprep.subr.bf16.mxu0 %v238
    %296 = vmatpush1.bf16.msra.mxu0 %v237
    %297 = vmatprep.subr.bf16.mxu0 %v242
    %298 = vmatpush1.bf16.msra.mxu0 %v241
    %299 = vmatprep.subr.bf16.mxu0 %v246
    %300 = vmatpush1.bf16.msra.mxu0 %v245
    %301 = vmatprep.subr.bf16.mxu0 %v250
    %302 = vmatpush1.bf16.msra.mxu0 %v249
    %303 = vmatprep.subr.bf16.mxu0 %v254
    %304 = vmatpush1.bf16.msra.mxu0 %v253
    %305 = vmatprep.subr.bf16.mxu0 0
    %306 = vmatpush1.bf16.msra.mxu0 0
    %307 = vmatprep.subr.bf16.mxu0 0
    %308 = vmatpush1.bf16.msra.mxu0 0
    %309 = vmatprep.subr.bf16.mxu0 0
    %310 = vmatpush1.bf16.msra.mxu0 0
    %311 = vmatprep.subr.bf16.mxu0 0
    %312 = vmatpush1.bf16.msra.mxu0 0
    %313 = vmatprep.subr.bf16.mxu0 0
    %314 = vmatpush1.bf16.msra.mxu0 0
    %315 = vmatprep.subr.bf16.mxu0 0
    %316 = vmatpush1.bf16.msra.mxu0 0
    %317 = vmatprep.subr.bf16.mxu0 0
    %318 = vmatpush1.bf16.msra.mxu0 0
    %319 = vmatprep.subr.bf16.mxu0 0
    %320 = vmatpush1.bf16.msra.mxu0 0
    %321 = vmatprep.mubr.bf16.mxu0 0
    %322 = vmatmul.mubr.bf16.gmra.mrb[0].mxu0 0
    %v323 = vpop.f32.mrb[0].mxu0
    %v324 = vadd.f32 0.0, %v323
    %v325 = vpop.f32.mrb[0].mxu0
    %v326 = vadd.f32 0.0, %v325
    %v327 = vpop.f32.mrb[0].mxu0
    %v328 = vpop.f32.mrb[0].mxu0
    %329 = vdwg.mxu0
    %330 = vmatprep.subr.bf16.mxu0 %v228
    %331 = vmatpush1.bf16.msra.mxu0 %v227
    %332 = vmatprep.subr.bf16.mxu0 %v232
    %333 = vmatpush1.bf16.msra.mxu0 %v231
    %334 = vmatprep.subr.bf16.mxu0 %v236
    %335 = vmatpush1.bf16.msra.mxu0 %v235
    %336 = vmatprep.subr.bf16.mxu0 %v240
    %337 = vmatpush1.bf16.msra.mxu0 %v239
    %338 = vmatprep.subr.bf16.mxu0 %v244
    %339 = vmatpush1.bf16.msra.mxu0 %v243
    %340 = vmatprep.subr.bf16.mxu0 %v248
    %341 = vmatpush1.bf16.msra.mxu0 %v247
    %342 = vmatprep.subr.bf16.mxu0 %v252
    %343 = vmatpush1.bf16.msra.mxu0 %v251
    %344 = vmatprep.subr.bf16.mxu0 %v256
    %345 = vmatpush1.bf16.msra.mxu0 %v255
    %346 = vmatprep.subr.bf16.mxu0 0
    %347 = vmatpush1.bf16.msra.mxu0 0
    %348 = vmatprep.subr.bf16.mxu0 0
    %349 = vmatpush1.bf16.msra.mxu0 0
    %350 = vmatprep.subr.bf16.mxu0 0
    %351 = vmatpush1.bf16.msra.mxu0 0
    %352 = vmatprep.subr.bf16.mxu0 0
    %353 = vmatpush1.bf16.msra.mxu0 0
    %354 = vmatprep.subr.bf16.mxu0 0
    %355 = vmatpush1.bf16.msra.mxu0 0
    %356 = vmatprep.subr.bf16.mxu0 0
    %357 = vmatpush1.bf16.msra.mxu0 0
    %358 = vmatprep.subr.bf16.mxu0 0
    %359 = vmatpush1.bf16.msra.mxu0 0
    %360 = vmatprep.subr.bf16.mxu0 0
    %361 = vmatpush1.bf16.msra.mxu0 0
    %362 = vmatprep.mubr.bf16.mxu0 0
    %363 = vmatmul.mubr.bf16.gmra.mrb[0].mxu0 0
    %v364 = vpop.f32.mrb[0].mxu0
    %v365 = vadd.f32 0.0, %v364
    %v366 = vpop.f32.mrb[0].mxu0
    %v367 = vadd.f32 0.0, %v366
    %v368 = vpop.f32.mrb[0].mxu0
    %v369 = vpop.f32.mrb[0].mxu0
    %370 = vdwg.mxu0
    %v371 = vadd.f32 %v125, %v324
    %v372 = vadd.f32 %v126, %v326
    %v373 = vadd.f32 %v127, %v365
    %v374 = vadd.f32 %v128, %v367
    %v375 = vmul.f32 %v371, 0.5
    %v376 = vmul.f32 %v372, 0.5
    %v377 = vmul.f32 %v373, 0.5
    %v378 = vtanh.pop %v375
    %v379 = vtanh.pop %v376
    %v380 = vtanh.pop %v377
    %v381 = vmul.f32 %v378, 0.5
    %v382 = vmul.f32 %v379, 0.5
    %v383 = vmul.f32 %v380, 0.5
    %v384 = vadd.f32 %v381, 0.5
    %v385 = vadd.f32 %v382, 0.5
    %v386 = vadd.f32 %v383, 0.5
    %v387 = vtanh.pop %v374
    %v388 = vmul.f32 %v385, 0.0
    %v389 = vmul.f32 %v384, %v387
    %v390 = vadd.f32 %v388, %v389
    %v391 = vtanh.pop %v390
    %v392 = vmul.f32 %v386, %v391
    %s393 = scalar_lea.vmem %s0, 8
    %v394 = vld [vmem:[%s393] sm:$0xff]
    %396 = vset.pattern.permute.xlu0 0
    %397 = vperm.xlu0 %396, %v394
    %v398 = vpop.permute.xlu0 %397
    %v400 = vmul.f32 %v398, %v76
    %v401 = vmul.f32 %v398, %v80
    %v402 = vmul.f32 %v398, %v84
    %v403 = vmul.f32 %v398, %v88
    %v404 = vadd.f32 %v400, %v98
    %v405 = vadd.f32 %v401, %v102
    %v406 = vadd.f32 %v402, %v106
    %v407 = vadd.f32 %v403, %v110
    %v408 = vpack.c.bf16 %v392, %v392
    %409 = vmatprep.subr.bf16.mxu0 %v226
    %410 = vmatpush1.bf16.msra.mxu0 %v225
    %411 = vmatprep.subr.bf16.mxu0 %v230
    %412 = vmatpush1.bf16.msra.mxu0 %v229
    %413 = vmatprep.subr.bf16.mxu0 %v234
    %414 = vmatpush1.bf16.msra.mxu0 %v233
    %415 = vmatprep.subr.bf16.mxu0 %v238
    %416 = vmatpush1.bf16.msra.mxu0 %v237
    %417 = vmatprep.subr.bf16.mxu0 %v242
    %418 = vmatpush1.bf16.msra.mxu0 %v241
    %419 = vmatprep.subr.bf16.mxu0 %v246
    %420 = vmatpush1.bf16.msra.mxu0 %v245
    %421 = vmatprep.subr.bf16.mxu0 %v250
    %422 = vmatpush1.bf16.msra.mxu0 %v249
    %423 = vmatprep.subr.bf16.mxu0 %v254
    %424 = vmatpush1.bf16.msra.mxu0 %v253
    %425 = vmatprep.subr.bf16.mxu0 0
    %426 = vmatpush1.bf16.msra.mxu0 0
    %427 = vmatprep.subr.bf16.mxu0 0
    %428 = vmatpush1.bf16.msra.mxu0 0
    %429 = vmatprep.subr.bf16.mxu0 0
    %430 = vmatpush1.bf16.msra.mxu0 0
    %431 = vmatprep.subr.bf16.mxu0 0
    %432 = vmatpush1.bf16.msra.mxu0 0
    %433 = vmatprep.subr.bf16.mxu0 0
    %434 = vmatpush1.bf16.msra.mxu0 0
    %435 = vmatprep.subr.bf16.mxu0 0
    %436 = vmatpush1.bf16.msra.mxu0 0
    %437 = vmatprep.subr.bf16.mxu0 0
    %438 = vmatpush1.bf16.msra.mxu0 0
    %439 = vmatprep.subr.bf16.mxu0 0
    %440 = vmatpush1.bf16.msra.mxu0 0
    %441 = vmatprep.mubr.bf16.mxu0 0
    %442 = vmatmul.mubr.bf16.gmra.mrb[0].mxu0 %v408
    %v443 = vpop.f32.mrb[0].mxu0
    %v444 = vadd.f32 0.0, %v443
    %v445 = vpop.f32.mrb[0].mxu0
    %v446 = vadd.f32 0.0, %v445
    %v447 = vpop.f32.mrb[0].mxu0
    %v448 = vpop.f32.mrb[0].mxu0
    %449 = vdwg.mxu0
    %450 = vmatprep.subr.bf16.mxu0 %v228
    %451 = vmatpush1.bf16.msra.mxu0 %v227
    %452 = vmatprep.subr.bf16.mxu0 %v232
    %453 = vmatpush1.bf16.msra.mxu0 %v231
    %454 = vmatprep.subr.bf16.mxu0 %v236
    %455 = vmatpush1.bf16.msra.mxu0 %v235
    %456 = vmatprep.subr.bf16.mxu0 %v240
    %457 = vmatpush1.bf16.msra.mxu0 %v239
    %458 = vmatprep.subr.bf16.mxu0 %v244
    %459 = vmatpush1.bf16.msra.mxu0 %v243
    %460 = vmatprep.subr.bf16.mxu0 %v248
    %461 = vmatpush1.bf16.msra.mxu0 %v247
    %462 = vmatprep.subr.bf16.mxu0 %v252
    %463 = vmatpush1.bf16.msra.mxu0 %v251
    %464 = vmatprep.subr.bf16.mxu0 %v256
    %465 = vmatpush1.bf16.msra.mxu0 %v255
    %466 = vmatprep.subr.bf16.mxu0 0
    %467 = vmatpush1.bf16.msra.mxu0 0
    %468 = vmatprep.subr.bf16.mxu0 0
    %469 = vmatpush1.bf16.msra.mxu0 0
    %470 = vmatprep.subr.bf16.mxu0 0
    %471 = vmatpush1.bf16.msra.mxu0 0
    %472 = vmatprep.subr.bf16.mxu0 0
    %473 = vmatpush1.bf16.msra.mxu0 0
    %474 = vmatprep.subr.bf16.mxu0 0
    %475 = vmatpush1.bf16.msra.mxu0 0
    %476 = vmatprep.subr.bf16.mxu0 0
    %477 = vmatpush1.bf16.msra.mxu0 0
    %478 = vmatprep.subr.bf16.mxu0 0
    %479 = vmatpush1.bf16.msra.mxu0 0
    %480 = vmatprep.subr.bf16.mxu0 0
    %481 = vmatpush1.bf16.msra.mxu0 0
    %482 = vmatprep.mubr.bf16.mxu0 0
    %483 = vmatmul.mubr.bf16.gmra.mrb[0].mxu0 %v408
    %v484 = vpop.f32.mrb[0].mxu0
    %v485 = vadd.f32 0.0, %v484
    %v486 = vpop.f32.mrb[0].mxu0
    %v487 = vadd.f32 0.0, %v486
    %v488 = vpop.f32.mrb[0].mxu0
    %v489 = vpop.f32.mrb[0].mxu0
    %490 = vdwg.mxu0
    %v491 = vadd.f32 %v404, %v444
    %v492 = vadd.f32 %v405, %v446
    %v493 = vadd.f32 %v406, %v485
    %v494 = vadd.f32 %v407, %v487
    %v495 = vmul.f32 %v491, 0.5
    %v496 = vmul.f32 %v492, 0.5
    %v497 = vmul.f32 %v493, 0.5
    %v498 = vtanh.pop %v495
    %v499 = vtanh.pop %v496
    %v500 = vtanh.pop %v497
    %v501 = vmul.f32 %v498, 0.5
    %v502 = vmul.f32 %v499, 0.5
    %v503 = vmul.f32 %v500, 0.5
    %v504 = vadd.f32 %v501, 0.5
    %v505 = vadd.f32 %v502, 0.5
    %v506 = vadd.f32 %v503, 0.5
    %v507 = vtanh.pop %v494
    %v508 = vmul.f32 %v505, %v390
    %v509 = vmul.f32 %v504, %v507
    %v510 = vadd.f32 %v508, %v509
    %v511 = vtanh.pop %v510
    %v512 = vmul.f32 %v506, %v511
    %s513 = scalar_lea.vmem %s0, 16
    %v514 = vld [vmem:[%s513] sm:$0xff]
    %516 = vset.pattern.permute.xlu0 0
    %517 = vperm.xlu0 %516, %v514
    %v518 = vpop.permute.xlu0 %517
    %v520 = vmul.f32 %v518, %v76
    %v521 = vmul.f32 %v518, %v80
    %v522 = vmul.f32 %v518, %v84
    %v523 = vmul.f32 %v518, %v88
    %v524 = vadd.f32 %v520, %v98
    %v525 = vadd.f32 %v521, %v102
    %v526 = vadd.f32 %v522, %v106
    %v527 = vadd.f32 %v523, %v110
    %v528 = vpack.c.bf16 %v512, %v512
    %529 = vmatprep.subr.bf16.mxu0 %v226
    %530 = vmatpush1.bf16.msra.mxu0 %v225
    %531 = vmatprep.subr.bf16.mxu0 %v230
    %532 = vmatpush1.bf16.msra.mxu0 %v229
    %533 = vmatprep.subr.bf16.mxu0 %v234
    %534 = vmatpush1.bf16.msra.mxu0 %v233
    %535 = vmatprep.subr.bf16.mxu0 %v238
    %536 = vmatpush1.bf16.msra.mxu0 %v237
    %537 = vmatprep.subr.bf16.mxu0 %v242
    %538 = vmatpush1.bf16.msra.mxu0 %v241
    %539 = vmatprep.subr.bf16.mxu0 %v246
    %540 = vmatpush1.bf16.msra.mxu0 %v245
    %541 = vmatprep.subr.bf16.mxu0 %v250
    %542 = vmatpush1.bf16.msra.mxu0 %v249
    %543 = vmatprep.subr.bf16.mxu0 %v254
    %544 = vmatpush1.bf16.msra.mxu0 %v253
    %545 = vmatprep.subr.bf16.mxu0 0
    %546 = vmatpush1.bf16.msra.mxu0 0
    %547 = vmatprep.subr.bf16.mxu0 0
    %548 = vmatpush1.bf16.msra.mxu0 0
    %549 = vmatprep.subr.bf16.mxu0 0
    %550 = vmatpush1.bf16.msra.mxu0 0
    %551 = vmatprep.subr.bf16.mxu0 0
    %552 = vmatpush1.bf16.msra.mxu0 0
    %553 = vmatprep.subr.bf16.mxu0 0
    %554 = vmatpush1.bf16.msra.mxu0 0
    %555 = vmatprep.subr.bf16.mxu0 0
    %556 = vmatpush1.bf16.msra.mxu0 0
    %557 = vmatprep.subr.bf16.mxu0 0
    %558 = vmatpush1.bf16.msra.mxu0 0
    %559 = vmatprep.subr.bf16.mxu0 0
    %560 = vmatpush1.bf16.msra.mxu0 0
    %561 = vmatprep.mubr.bf16.mxu0 0
    %562 = vmatmul.mubr.bf16.gmra.mrb[0].mxu0 %v528
    %v563 = vpop.f32.mrb[0].mxu0
    %v564 = vadd.f32 0.0, %v563
    %v565 = vpop.f32.mrb[0].mxu0
    %v566 = vadd.f32 0.0, %v565
    %v567 = vpop.f32.mrb[0].mxu0
    %v568 = vpop.f32.mrb[0].mxu0
    %569 = vdwg.mxu0
    %570 = vmatprep.subr.bf16.mxu0 %v228
    %571 = vmatpush1.bf16.msra.mxu0 %v227
    %572 = vmatprep.subr.bf16.mxu0 %v232
    %573 = vmatpush1.bf16.msra.mxu0 %v231
    %574 = vmatprep.subr.bf16.mxu0 %v236
    %575 = vmatpush1.bf16.msra.mxu0 %v235
    %576 = vmatprep.subr.bf16.mxu0 %v240
    %577 = vmatpush1.bf16.msra.mxu0 %v239
    %578 = vmatprep.subr.bf16.mxu0 %v244
    %579 = vmatpush1.bf16.msra.mxu0 %v243
    %580 = vmatprep.subr.bf16.mxu0 %v248
    %581 = vmatpush1.bf16.msra.mxu0 %v247
    %582 = vmatprep.subr.bf16.mxu0 %v252
    %583 = vmatpush1.bf16.msra.mxu0 %v251
    %584 = vmatprep.subr.bf16.mxu0 %v256
    %585 = vmatpush1.bf16.msra.mxu0 %v255
    %586 = vmatprep.subr.bf16.mxu0 0
    %587 = vmatpush1.bf16.msra.mxu0 0
    %588 = vmatprep.subr.bf16.mxu0 0
    %589 = vmatpush1.bf16.msra.mxu0 0
    %590 = vmatprep.subr.bf16.mxu0 0
    %591 = vmatpush1.bf16.msra.mxu0 0
    %592 = vmatprep.subr.bf16.mxu0 0
    %593 = vmatpush1.bf16.msra.mxu0 0
    %594 = vmatprep.subr.bf16.mxu0 0
    %595 = vmatpush1.bf16.msra.mxu0 0
    %596 = vmatprep.subr.bf16.mxu0 0
    %597 = vmatpush1.bf16.msra.mxu0 0
    %598 = vmatprep.subr.bf16.mxu0 0
    %599 = vmatpush1.bf16.msra.mxu0 0
    %600 = vmatprep.subr.bf16.mxu0 0
    %601 = vmatpush1.bf16.msra.mxu0 0
    %602 = vmatprep.mubr.bf16.mxu0 0
    %603 = vmatmul.mubr.bf16.gmra.mrb[0].mxu0 %v528
    %v604 = vpop.f32.mrb[0].mxu0
    %v605 = vadd.f32 0.0, %v604
    %v606 = vpop.f32.mrb[0].mxu0
    %v607 = vadd.f32 0.0, %v606
    %v608 = vpop.f32.mrb[0].mxu0
    %v609 = vpop.f32.mrb[0].mxu0
    %610 = vdwg.mxu0
    %v611 = vadd.f32 %v524, %v564
    %v612 = vadd.f32 %v525, %v566
    %v613 = vadd.f32 %v526, %v605
    %v614 = vadd.f32 %v527, %v607
    %v615 = vmul.f32 %v611, 0.5
    %v616 = vmul.f32 %v612, 0.5
    %v617 = vmul.f32 %v613, 0.5
    %v618 = vtanh.pop %v615
    %v619 = vtanh.pop %v616
    %v620 = vtanh.pop %v617
    %v621 = vmul.f32 %v618, 0.5
    %v622 = vmul.f32 %v619, 0.5
    %v623 = vmul.f32 %v620, 0.5
    %v624 = vadd.f32 %v621, 0.5
    %v625 = vadd.f32 %v622, 0.5
    %v626 = vadd.f32 %v623, 0.5
    %v627 = vtanh.pop %v614
    %v628 = vmul.f32 %v625, %v510
    %v629 = vmul.f32 %v624, %v627
    %v630 = vadd.f32 %v628, %v629
    %v631 = vtanh.pop %v630
    %v632 = vmul.f32 %v626, %v631
    %s633 = scalar_lea.vmem %s0, 24
    %v634 = vld [vmem:[%s633] sm:$0xff]
    %636 = vset.pattern.permute.xlu0 0
    %637 = vperm.xlu0 %636, %v634
    %v638 = vpop.permute.xlu0 %637
    %v640 = vmul.f32 %v638, %v76
    %v641 = vmul.f32 %v638, %v80
    %v642 = vmul.f32 %v638, %v84
    %v643 = vmul.f32 %v638, %v88
    %v644 = vadd.f32 %v640, %v98
    %v645 = vadd.f32 %v641, %v102
    %v646 = vadd.f32 %v642, %v106
    %v647 = vadd.f32 %v643, %v110
    %v648 = vpack.c.bf16 %v632, %v632
    %649 = vmatprep.subr.bf16.mxu0 %v226
    %650 = vmatpush1.bf16.msra.mxu0 %v225
    %651 = vmatprep.subr.bf16.mxu0 %v230
    %652 = vmatpush1.bf16.msra.mxu0 %v229
    %653 = vmatprep.subr.bf16.mxu0 %v234
    %654 = vmatpush1.bf16.msra.mxu0 %v233
    %655 = vmatprep.subr.bf16.mxu0 %v238
    %656 = vmatpush1.bf16.msra.mxu0 %v237
    %657 = vmatprep.subr.bf16.mxu0 %v242
    %658 = vmatpush1.bf16.msra.mxu0 %v241
    %659 = vmatprep.subr.bf16.mxu0 %v246
    %660 = vmatpush1.bf16.msra.mxu0 %v245
    %661 = vmatprep.subr.bf16.mxu0 %v250
    %662 = vmatpush1.bf16.msra.mxu0 %v249
    %663 = vmatprep.subr.bf16.mxu0 %v254
    %664 = vmatpush1.bf16.msra.mxu0 %v253
    %665 = vmatprep.subr.bf16.mxu0 0
    %666 = vmatpush1.bf16.msra.mxu0 0
    %667 = vmatprep.subr.bf16.mxu0 0
    %668 = vmatpush1.bf16.msra.mxu0 0
    %669 = vmatprep.subr.bf16.mxu0 0
    %670 = vmatpush1.bf16.msra.mxu0 0
    %671 = vmatprep.subr.bf16.mxu0 0
    %672 = vmatpush1.bf16.msra.mxu0 0
    %673 = vmatprep.subr.bf16.mxu0 0
    %674 = vmatpush1.bf16.msra.mxu0 0
    %675 = vmatprep.subr.bf16.mxu0 0
    %676 = vmatpush1.bf16.msra.mxu0 0
    %677 = vmatprep.subr.bf16.mxu0 0
    %678 = vmatpush1.bf16.msra.mxu0 0
    %679 = vmatprep.subr.bf16.mxu0 0
    %680 = vmatpush1.bf16.msra.mxu0 0
    %681 = vmatprep.mubr.bf16.mxu0 0
    %682 = vmatmul.mubr.bf16.gmra.mrb[0].mxu0 %v648
    %v683 = vpop.f32.mrb[0].mxu0
    %v684 = vadd.f32 0.0, %v683
    %v685 = vpop.f32.mrb[0].mxu0
    %v686 = vadd.f32 0.0, %v685
    %v687 = vpop.f32.mrb[0].mxu0
    %v688 = vpop.f32.mrb[0].mxu0
    %689 = vdwg.mxu0
    %690 = vmatprep.subr.bf16.mxu0 %v228
    %691 = vmatpush1.bf16.msra.mxu0 %v227
    %692 = vmatprep.subr.bf16.mxu0 %v232
    %693 = vmatpush1.bf16.msra.mxu0 %v231
    %694 = vmatprep.subr.bf16.mxu0 %v236
    %695 = vmatpush1.bf16.msra.mxu0 %v235
    %696 = vmatprep.subr.bf16.mxu0 %v240
    %697 = vmatpush1.bf16.msra.mxu0 %v239
    %698 = vmatprep.subr.bf16.mxu0 %v244
    %699 = vmatpush1.bf16.msra.mxu0 %v243
    %700 = vmatprep.subr.bf16.mxu0 %v248
    %701 = vmatpush1.bf16.msra.mxu0 %v247
    %702 = vmatprep.subr.bf16.mxu0 %v252
    %703 = vmatpush1.bf16.msra.mxu0 %v251
    %704 = vmatprep.subr.bf16.mxu0 %v256
    %705 = vmatpush1.bf16.msra.mxu0 %v255
    %706 = vmatprep.subr.bf16.mxu0 0
    %707 = vmatpush1.bf16.msra.mxu0 0
    %708 = vmatprep.subr.bf16.mxu0 0
    %709 = vmatpush1.bf16.msra.mxu0 0
    %710 = vmatprep.subr.bf16.mxu0 0
    %711 = vmatpush1.bf16.msra.mxu0 0
    %712 = vmatprep.subr.bf16.mxu0 0
    %713 = vmatpush1.bf16.msra.mxu0 0
    %714 = vmatprep.subr.bf16.mxu0 0
    %715 = vmatpush1.bf16.msra.mxu0 0
    %716 = vmatprep.subr.bf16.mxu0 0
    %717 = vmatpush1.bf16.msra.mxu0 0
    %718 = vmatprep.subr.bf16.mxu0 0
    %719 = vmatpush1.bf16.msra.mxu0 0
    %720 = vmatprep.subr.bf16.mxu0 0
    %721 = vmatpush1.bf16.msra.mxu0 0
    %722 = vmatprep.mubr.bf16.mxu0 0
    %723 = vmatmul.mubr.bf16.gmra.mrb[0].mxu0 %v648
    %v724 = vpop.f32.mrb[0].mxu0
    %v725 = vadd.f32 0.0, %v724
    %v726 = vpop.f32.mrb[0].mxu0
    %v727 = vadd.f32 0.0, %v726
    %v728 = vpop.f32.mrb[0].mxu0
    %v729 = vpop.f32.mrb[0].mxu0
    %730 = vdwg.mxu0
    %v731 = vadd.f32 %v644, %v684
    %v732 = vadd.f32 %v645, %v686
    %v733 = vadd.f32 %v646, %v725
    %v734 = vadd.f32 %v647, %v727
    %v735 = vmul.f32 %v731, 0.5
    %v736 = vmul.f32 %v732, 0.5
    %v737 = vmul.f32 %v733, 0.5
    %v738 = vtanh.pop %v735
    %v739 = vtanh.pop %v736
    %v740 = vtanh.pop %v737
    %v741 = vmul.f32 %v738, 0.5
    %v742 = vmul.f32 %v739, 0.5
    %v743 = vmul.f32 %v740, 0.5
    %v744 = vadd.f32 %v741, 0.5
    %v745 = vadd.f32 %v742, 0.5
    %v746 = vadd.f32 %v743, 0.5
    %v747 = vtanh.pop %v734
    %v748 = vmul.f32 %v745, %v630
    %v749 = vmul.f32 %v744, %v747
    %v750 = vadd.f32 %v748, %v749
    %v751 = vtanh.pop %v750
    %v752 = vmul.f32 %v746, %v751
    %s753 = scalar_lea.vmem %s0, 32
    %v754 = vld [vmem:[%s753] sm:$0xff]
    %756 = vset.pattern.permute.xlu0 0
    %757 = vperm.xlu0 %756, %v754
    %v758 = vpop.permute.xlu0 %757
    %v760 = vmul.f32 %v758, %v76
    %v761 = vmul.f32 %v758, %v80
    %v762 = vmul.f32 %v758, %v84
    %v763 = vmul.f32 %v758, %v88
    %v764 = vadd.f32 %v760, %v98
    %v765 = vadd.f32 %v761, %v102
    %v766 = vadd.f32 %v762, %v106
    %v767 = vadd.f32 %v763, %v110
    %v768 = vpack.c.bf16 %v752, %v752
    %769 = vmatprep.subr.bf16.mxu0 %v226
    %770 = vmatpush1.bf16.msra.mxu0 %v225
    %771 = vmatprep.subr.bf16.mxu0 %v230
    %772 = vmatpush1.bf16.msra.mxu0 %v229
    %773 = vmatprep.subr.bf16.mxu0 %v234
    %774 = vmatpush1.bf16.msra.mxu0 %v233
    %775 = vmatprep.subr.bf16.mxu0 %v238
    %776 = vmatpush1.bf16.msra.mxu0 %v237
    %777 = vmatprep.subr.bf16.mxu0 %v242
    %778 = vmatpush1.bf16.msra.mxu0 %v241
    %779 = vmatprep.subr.bf16.mxu0 %v246
    %780 = vmatpush1.bf16.msra.mxu0 %v245
    %781 = vmatprep.subr.bf16.mxu0 %v250
    %782 = vmatpush1.bf16.msra.mxu0 %v249
    %783 = vmatprep.subr.bf16.mxu0 %v254
    %784 = vmatpush1.bf16.msra.mxu0 %v253
    %785 = vmatprep.subr.bf16.mxu0 0
    %786 = vmatpush1.bf16.msra.mxu0 0
    %787 = vmatprep.subr.bf16.mxu0 0
    %788 = vmatpush1.bf16.msra.mxu0 0
    %789 = vmatprep.subr.bf16.mxu0 0
    %790 = vmatpush1.bf16.msra.mxu0 0
    %791 = vmatprep.subr.bf16.mxu0 0
    %792 = vmatpush1.bf16.msra.mxu0 0
    %793 = vmatprep.subr.bf16.mxu0 0
    %794 = vmatpush1.bf16.msra.mxu0 0
    %795 = vmatprep.subr.bf16.mxu0 0
    %796 = vmatpush1.bf16.msra.mxu0 0
    %797 = vmatprep.subr.bf16.mxu0 0
    %798 = vmatpush1.bf16.msra.mxu0 0
    %799 = vmatprep.subr.bf16.mxu0 0
    %800 = vmatpush1.bf16.msra.mxu0 0
    %801 = vmatprep.mubr.bf16.mxu0 0
    %802 = vmatmul.mubr.bf16.gmra.mrb[0].mxu0 %v768
    %v803 = vpop.f32.mrb[0].mxu0
    %v804 = vadd.f32 0.0, %v803
    %v805 = vpop.f32.mrb[0].mxu0
    %v806 = vadd.f32 0.0, %v805
    %v807 = vpop.f32.mrb[0].mxu0
    %v808 = vpop.f32.mrb[0].mxu0
    %809 = vdwg.mxu0
    %810 = vmatprep.subr.bf16.mxu0 %v228
    %811 = vmatpush1.bf16.msra.mxu0 %v227
    %812 = vmatprep.subr.bf16.mxu0 %v232
    %813 = vmatpush1.bf16.msra.mxu0 %v231
    %814 = vmatprep.subr.bf16.mxu0 %v236
    %815 = vmatpush1.bf16.msra.mxu0 %v235
    %816 = vmatprep.subr.bf16.mxu0 %v240
    %817 = vmatpush1.bf16.msra.mxu0 %v239
    %818 = vmatprep.subr.bf16.mxu0 %v244
    %819 = vmatpush1.bf16.msra.mxu0 %v243
    %820 = vmatprep.subr.bf16.mxu0 %v248
    %821 = vmatpush1.bf16.msra.mxu0 %v247
    %822 = vmatprep.subr.bf16.mxu0 %v252
    %823 = vmatpush1.bf16.msra.mxu0 %v251
    %824 = vmatprep.subr.bf16.mxu0 %v256
    %825 = vmatpush1.bf16.msra.mxu0 %v255
    %826 = vmatprep.subr.bf16.mxu0 0
    %827 = vmatpush1.bf16.msra.mxu0 0
    %828 = vmatprep.subr.bf16.mxu0 0
    %829 = vmatpush1.bf16.msra.mxu0 0
    %830 = vmatprep.subr.bf16.mxu0 0
    %831 = vmatpush1.bf16.msra.mxu0 0
    %832 = vmatprep.subr.bf16.mxu0 0
    %833 = vmatpush1.bf16.msra.mxu0 0
    %834 = vmatprep.subr.bf16.mxu0 0
    %835 = vmatpush1.bf16.msra.mxu0 0
    %836 = vmatprep.subr.bf16.mxu0 0
    %837 = vmatpush1.bf16.msra.mxu0 0
    %838 = vmatprep.subr.bf16.mxu0 0
    %839 = vmatpush1.bf16.msra.mxu0 0
    %840 = vmatprep.subr.bf16.mxu0 0
    %841 = vmatpush1.bf16.msra.mxu0 0
    %842 = vmatprep.mubr.bf16.mxu0 0
    %843 = vmatmul.mubr.bf16.gmra.mrb[0].mxu0 %v768
    %v844 = vpop.f32.mrb[0].mxu0
    %v845 = vadd.f32 0.0, %v844
    %v846 = vpop.f32.mrb[0].mxu0
    %v847 = vadd.f32 0.0, %v846
    %v848 = vpop.f32.mrb[0].mxu0
    %v849 = vpop.f32.mrb[0].mxu0
    %850 = vdwg.mxu0
    %v851 = vadd.f32 %v764, %v804
    %v852 = vadd.f32 %v765, %v806
    %v853 = vadd.f32 %v766, %v845
    %v854 = vadd.f32 %v767, %v847
    %v855 = vmul.f32 %v851, 0.5
    %v856 = vmul.f32 %v852, 0.5
    %v857 = vmul.f32 %v853, 0.5
    %v858 = vtanh.pop %v855
    %v859 = vtanh.pop %v856
    %v860 = vtanh.pop %v857
    %v861 = vmul.f32 %v858, 0.5
    %v862 = vmul.f32 %v859, 0.5
    %v863 = vmul.f32 %v860, 0.5
    %v864 = vadd.f32 %v861, 0.5
    %v865 = vadd.f32 %v862, 0.5
    %v866 = vadd.f32 %v863, 0.5
    %v867 = vtanh.pop %v854
    %v868 = vmul.f32 %v865, %v750
    %v869 = vmul.f32 %v864, %v867
    %v870 = vadd.f32 %v868, %v869
    %v871 = vtanh.pop %v870
    %v872 = vmul.f32 %v866, %v871
    %s873 = scalar_lea.vmem %s0, 40
    %v874 = vld [vmem:[%s873] sm:$0xff]
    %876 = vset.pattern.permute.xlu0 0
    %877 = vperm.xlu0 %876, %v874
    %v878 = vpop.permute.xlu0 %877
    %v880 = vmul.f32 %v878, %v76
    %v881 = vmul.f32 %v878, %v80
    %v882 = vmul.f32 %v878, %v84
    %v883 = vmul.f32 %v878, %v88
    %v884 = vadd.f32 %v880, %v98
    %v885 = vadd.f32 %v881, %v102
    %v886 = vadd.f32 %v882, %v106
    %v887 = vadd.f32 %v883, %v110
    %v888 = vpack.c.bf16 %v872, %v872
    %889 = vmatprep.subr.bf16.mxu0 %v226
    %890 = vmatpush1.bf16.msra.mxu0 %v225
    %891 = vmatprep.subr.bf16.mxu0 %v230
    %892 = vmatpush1.bf16.msra.mxu0 %v229
    %893 = vmatprep.subr.bf16.mxu0 %v234
    %894 = vmatpush1.bf16.msra.mxu0 %v233
    %895 = vmatprep.subr.bf16.mxu0 %v238
    %896 = vmatpush1.bf16.msra.mxu0 %v237
    %897 = vmatprep.subr.bf16.mxu0 %v242
    %898 = vmatpush1.bf16.msra.mxu0 %v241
    %899 = vmatprep.subr.bf16.mxu0 %v246
    %900 = vmatpush1.bf16.msra.mxu0 %v245
    %901 = vmatprep.subr.bf16.mxu0 %v250
    %902 = vmatpush1.bf16.msra.mxu0 %v249
    %903 = vmatprep.subr.bf16.mxu0 %v254
    %904 = vmatpush1.bf16.msra.mxu0 %v253
    %905 = vmatprep.subr.bf16.mxu0 0
    %906 = vmatpush1.bf16.msra.mxu0 0
    %907 = vmatprep.subr.bf16.mxu0 0
    %908 = vmatpush1.bf16.msra.mxu0 0
    %909 = vmatprep.subr.bf16.mxu0 0
    %910 = vmatpush1.bf16.msra.mxu0 0
    %911 = vmatprep.subr.bf16.mxu0 0
    %912 = vmatpush1.bf16.msra.mxu0 0
    %913 = vmatprep.subr.bf16.mxu0 0
    %914 = vmatpush1.bf16.msra.mxu0 0
    %915 = vmatprep.subr.bf16.mxu0 0
    %916 = vmatpush1.bf16.msra.mxu0 0
    %917 = vmatprep.subr.bf16.mxu0 0
    %918 = vmatpush1.bf16.msra.mxu0 0
    %919 = vmatprep.subr.bf16.mxu0 0
    %920 = vmatpush1.bf16.msra.mxu0 0
    %921 = vmatprep.mubr.bf16.mxu0 0
    %922 = vmatmul.mubr.bf16.gmra.mrb[0].mxu0 %v888
    %v923 = vpop.f32.mrb[0].mxu0
    %v924 = vadd.f32 0.0, %v923
    %v925 = vpop.f32.mrb[0].mxu0
    %v926 = vadd.f32 0.0, %v925
    %v927 = vpop.f32.mrb[0].mxu0
    %v928 = vpop.f32.mrb[0].mxu0
    %929 = vdwg.mxu0
    %930 = vmatprep.subr.bf16.mxu0 %v228
    %931 = vmatpush1.bf16.msra.mxu0 %v227
    %932 = vmatprep.subr.bf16.mxu0 %v232
    %933 = vmatpush1.bf16.msra.mxu0 %v231
    %934 = vmatprep.subr.bf16.mxu0 %v236
    %935 = vmatpush1.bf16.msra.mxu0 %v235
    %936 = vmatprep.subr.bf16.mxu0 %v240
    %937 = vmatpush1.bf16.msra.mxu0 %v239
    %938 = vmatprep.subr.bf16.mxu0 %v244
    %939 = vmatpush1.bf16.msra.mxu0 %v243
    %940 = vmatprep.subr.bf16.mxu0 %v248
    %941 = vmatpush1.bf16.msra.mxu0 %v247
    %942 = vmatprep.subr.bf16.mxu0 %v252
    %943 = vmatpush1.bf16.msra.mxu0 %v251
    %944 = vmatprep.subr.bf16.mxu0 %v256
    %945 = vmatpush1.bf16.msra.mxu0 %v255
    %946 = vmatprep.subr.bf16.mxu0 0
    %947 = vmatpush1.bf16.msra.mxu0 0
    %948 = vmatprep.subr.bf16.mxu0 0
    %949 = vmatpush1.bf16.msra.mxu0 0
    %950 = vmatprep.subr.bf16.mxu0 0
    %951 = vmatpush1.bf16.msra.mxu0 0
    %952 = vmatprep.subr.bf16.mxu0 0
    %953 = vmatpush1.bf16.msra.mxu0 0
    %954 = vmatprep.subr.bf16.mxu0 0
    %955 = vmatpush1.bf16.msra.mxu0 0
    %956 = vmatprep.subr.bf16.mxu0 0
    %957 = vmatpush1.bf16.msra.mxu0 0
    %958 = vmatprep.subr.bf16.mxu0 0
    %959 = vmatpush1.bf16.msra.mxu0 0
    %960 = vmatprep.subr.bf16.mxu0 0
    %961 = vmatpush1.bf16.msra.mxu0 0
    %962 = vmatprep.mubr.bf16.mxu0 0
    %963 = vmatmul.mubr.bf16.gmra.mrb[0].mxu0 %v888
    %v964 = vpop.f32.mrb[0].mxu0
    %v965 = vadd.f32 0.0, %v964
    %v966 = vpop.f32.mrb[0].mxu0
    %v967 = vadd.f32 0.0, %v966
    %v968 = vpop.f32.mrb[0].mxu0
    %v969 = vpop.f32.mrb[0].mxu0
    %970 = vdwg.mxu0
    %v971 = vadd.f32 %v884, %v924
    %v972 = vadd.f32 %v885, %v926
    %v973 = vadd.f32 %v886, %v965
    %v974 = vadd.f32 %v887, %v967
    %v975 = vmul.f32 %v971, 0.5
    %v976 = vmul.f32 %v972, 0.5
    %v977 = vmul.f32 %v973, 0.5
    %v978 = vtanh.pop %v975
    %v979 = vtanh.pop %v976
    %v980 = vtanh.pop %v977
    %v981 = vmul.f32 %v978, 0.5
    %v982 = vmul.f32 %v979, 0.5
    %v983 = vmul.f32 %v980, 0.5
    %v984 = vadd.f32 %v981, 0.5
    %v985 = vadd.f32 %v982, 0.5
    %v986 = vadd.f32 %v983, 0.5
    %v987 = vtanh.pop %v974
    %v988 = vmul.f32 %v985, %v870
    %v989 = vmul.f32 %v984, %v987
    %v990 = vadd.f32 %v988, %v989
    %v991 = vtanh.pop %v990
    %v992 = vmul.f32 %v986, %v991
    %s993 = scalar_lea.vmem %s0, 48
    %v994 = vld [vmem:[%s993] sm:$0xff]
    %996 = vset.pattern.permute.xlu0 0
    %997 = vperm.xlu0 %996, %v994
    %v998 = vpop.permute.xlu0 %997
    %v1000 = vmul.f32 %v998, %v76
    %v1001 = vmul.f32 %v998, %v80
    %v1002 = vmul.f32 %v998, %v84
    %v1003 = vmul.f32 %v998, %v88
    %v1004 = vadd.f32 %v1000, %v98
    %v1005 = vadd.f32 %v1001, %v102
    %v1006 = vadd.f32 %v1002, %v106
    %v1007 = vadd.f32 %v1003, %v110
    %v1008 = vpack.c.bf16 %v992, %v992
    %1009 = vmatprep.subr.bf16.mxu0 %v226
    %1010 = vmatpush1.bf16.msra.mxu0 %v225
    %1011 = vmatprep.subr.bf16.mxu0 %v230
    %1012 = vmatpush1.bf16.msra.mxu0 %v229
    %1013 = vmatprep.subr.bf16.mxu0 %v234
    %1014 = vmatpush1.bf16.msra.mxu0 %v233
    %1015 = vmatprep.subr.bf16.mxu0 %v238
    %1016 = vmatpush1.bf16.msra.mxu0 %v237
    %1017 = vmatprep.subr.bf16.mxu0 %v242
    %1018 = vmatpush1.bf16.msra.mxu0 %v241
    %1019 = vmatprep.subr.bf16.mxu0 %v246
    %1020 = vmatpush1.bf16.msra.mxu0 %v245
    %1021 = vmatprep.subr.bf16.mxu0 %v250
    %1022 = vmatpush1.bf16.msra.mxu0 %v249
    %1023 = vmatprep.subr.bf16.mxu0 %v254
    %1024 = vmatpush1.bf16.msra.mxu0 %v253
    %1025 = vmatprep.subr.bf16.mxu0 0
    %1026 = vmatpush1.bf16.msra.mxu0 0
    %1027 = vmatprep.subr.bf16.mxu0 0
    %1028 = vmatpush1.bf16.msra.mxu0 0
    %1029 = vmatprep.subr.bf16.mxu0 0
    %1030 = vmatpush1.bf16.msra.mxu0 0
    %1031 = vmatprep.subr.bf16.mxu0 0
    %1032 = vmatpush1.bf16.msra.mxu0 0
    %1033 = vmatprep.subr.bf16.mxu0 0
    %1034 = vmatpush1.bf16.msra.mxu0 0
    %1035 = vmatprep.subr.bf16.mxu0 0
    %1036 = vmatpush1.bf16.msra.mxu0 0
    %1037 = vmatprep.subr.bf16.mxu0 0
    %1038 = vmatpush1.bf16.msra.mxu0 0
    %1039 = vmatprep.subr.bf16.mxu0 0
    %1040 = vmatpush1.bf16.msra.mxu0 0
    %1041 = vmatprep.mubr.bf16.mxu0 0
    %1042 = vmatmul.mubr.bf16.gmra.mrb[0].mxu0 %v1008
    %v1043 = vpop.f32.mrb[0].mxu0
    %v1044 = vadd.f32 0.0, %v1043
    %v1045 = vpop.f32.mrb[0].mxu0
    %v1046 = vadd.f32 0.0, %v1045
    %v1047 = vpop.f32.mrb[0].mxu0
    %v1048 = vpop.f32.mrb[0].mxu0
    %1049 = vdwg.mxu0
    %1050 = vmatprep.subr.bf16.mxu0 %v228
    %1051 = vmatpush1.bf16.msra.mxu0 %v227
    %1052 = vmatprep.subr.bf16.mxu0 %v232
    %1053 = vmatpush1.bf16.msra.mxu0 %v231
    %1054 = vmatprep.subr.bf16.mxu0 %v236
    %1055 = vmatpush1.bf16.msra.mxu0 %v235
    %1056 = vmatprep.subr.bf16.mxu0 %v240
    %1057 = vmatpush1.bf16.msra.mxu0 %v239
    %1058 = vmatprep.subr.bf16.mxu0 %v244
    %1059 = vmatpush1.bf16.msra.mxu0 %v243
    %1060 = vmatprep.subr.bf16.mxu0 %v248
    %1061 = vmatpush1.bf16.msra.mxu0 %v247
    %1062 = vmatprep.subr.bf16.mxu0 %v252
    %1063 = vmatpush1.bf16.msra.mxu0 %v251
    %1064 = vmatprep.subr.bf16.mxu0 %v256
    %1065 = vmatpush1.bf16.msra.mxu0 %v255
    %1066 = vmatprep.subr.bf16.mxu0 0
    %1067 = vmatpush1.bf16.msra.mxu0 0
    %1068 = vmatprep.subr.bf16.mxu0 0
    %1069 = vmatpush1.bf16.msra.mxu0 0
    %1070 = vmatprep.subr.bf16.mxu0 0
    %1071 = vmatpush1.bf16.msra.mxu0 0
    %1072 = vmatprep.subr.bf16.mxu0 0
    %1073 = vmatpush1.bf16.msra.mxu0 0
    %1074 = vmatprep.subr.bf16.mxu0 0
    %1075 = vmatpush1.bf16.msra.mxu0 0
    %1076 = vmatprep.subr.bf16.mxu0 0
    %1077 = vmatpush1.bf16.msra.mxu0 0
    %1078 = vmatprep.subr.bf16.mxu0 0
    %1079 = vmatpush1.bf16.msra.mxu0 0
    %1080 = vmatprep.subr.bf16.mxu0 0
    %1081 = vmatpush1.bf16.msra.mxu0 0
    %1082 = vmatprep.mubr.bf16.mxu0 0
    %1083 = vmatmul.mubr.bf16.gmra.mrb[0].mxu0 %v1008
    %v1084 = vpop.f32.mrb[0].mxu0
    %v1085 = vadd.f32 0.0, %v1084
    %v1086 = vpop.f32.mrb[0].mxu0
    %v1087 = vadd.f32 0.0, %v1086
    %v1088 = vpop.f32.mrb[0].mxu0
    %v1089 = vpop.f32.mrb[0].mxu0
    %1090 = vdwg.mxu0
    %v1091 = vadd.f32 %v1004, %v1044
    %v1092 = vadd.f32 %v1005, %v1046
    %v1093 = vadd.f32 %v1006, %v1085
    %v1094 = vadd.f32 %v1007, %v1087
    %v1095 = vmul.f32 %v1091, 0.5
    %v1096 = vmul.f32 %v1092, 0.5
    %v1097 = vmul.f32 %v1093, 0.5
    %v1098 = vtanh.pop %v1095
    %v1099 = vtanh.pop %v1096
    %v1100 = vtanh.pop %v1097
    %v1101 = vmul.f32 %v1098, 0.5
    %v1102 = vmul.f32 %v1099, 0.5
    %v1103 = vmul.f32 %v1100, 0.5
    %v1104 = vadd.f32 %v1101, 0.5
    %v1105 = vadd.f32 %v1102, 0.5
    %v1106 = vadd.f32 %v1103, 0.5
    %v1107 = vtanh.pop %v1094
    %v1108 = vmul.f32 %v1105, %v990
    %v1109 = vmul.f32 %v1104, %v1107
    %v1110 = vadd.f32 %v1108, %v1109
    %v1111 = vtanh.pop %v1110
    %v1112 = vmul.f32 %v1106, %v1111
    %s1113 = scalar_lea.vmem %s0, 56
    %v1114 = vld [vmem:[%s1113] sm:$0xff]
    %1116 = vset.pattern.permute.xlu0 0
    %1117 = vperm.xlu0 %1116, %v1114
    %v1118 = vpop.permute.xlu0 %1117
    %v1120 = vmul.f32 %v1118, %v76
    %v1121 = vmul.f32 %v1118, %v80
    %v1122 = vmul.f32 %v1118, %v84
    %v1123 = vmul.f32 %v1118, %v88
    %v1124 = vadd.f32 %v1120, %v98
    %v1125 = vadd.f32 %v1121, %v102
    %v1126 = vadd.f32 %v1122, %v106
    %v1127 = vadd.f32 %v1123, %v110
    %v1128 = vpack.c.bf16 %v1112, %v1112
    %1129 = vmatprep.subr.bf16.mxu0 %v226
    %1130 = vmatpush1.bf16.msra.mxu0 %v225
    %1131 = vmatprep.subr.bf16.mxu0 %v230
    %1132 = vmatpush1.bf16.msra.mxu0 %v229
    %1133 = vmatprep.subr.bf16.mxu0 %v234
    %1134 = vmatpush1.bf16.msra.mxu0 %v233
    %1135 = vmatprep.subr.bf16.mxu0 %v238
    %1136 = vmatpush1.bf16.msra.mxu0 %v237
    %1137 = vmatprep.subr.bf16.mxu0 %v242
    %1138 = vmatpush1.bf16.msra.mxu0 %v241
    %1139 = vmatprep.subr.bf16.mxu0 %v246
    %1140 = vmatpush1.bf16.msra.mxu0 %v245
    %1141 = vmatprep.subr.bf16.mxu0 %v250
    %1142 = vmatpush1.bf16.msra.mxu0 %v249
    %1143 = vmatprep.subr.bf16.mxu0 %v254
    %1144 = vmatpush1.bf16.msra.mxu0 %v253
    %1145 = vmatprep.subr.bf16.mxu0 0
    %1146 = vmatpush1.bf16.msra.mxu0 0
    %1147 = vmatprep.subr.bf16.mxu0 0
    %1148 = vmatpush1.bf16.msra.mxu0 0
    %1149 = vmatprep.subr.bf16.mxu0 0
    %1150 = vmatpush1.bf16.msra.mxu0 0
    %1151 = vmatprep.subr.bf16.mxu0 0
    %1152 = vmatpush1.bf16.msra.mxu0 0
    %1153 = vmatprep.subr.bf16.mxu0 0
    %1154 = vmatpush1.bf16.msra.mxu0 0
    %1155 = vmatprep.subr.bf16.mxu0 0
    %1156 = vmatpush1.bf16.msra.mxu0 0
    %1157 = vmatprep.subr.bf16.mxu0 0
    %1158 = vmatpush1.bf16.msra.mxu0 0
    %1159 = vmatprep.subr.bf16.mxu0 0
    %1160 = vmatpush1.bf16.msra.mxu0 0
    %1161 = vmatprep.mubr.bf16.mxu0 0
    %1162 = vmatmul.mubr.bf16.gmra.mrb[0].mxu0 %v1128
    %v1163 = vpop.f32.mrb[0].mxu0
    %v1164 = vadd.f32 0.0, %v1163
    %v1165 = vpop.f32.mrb[0].mxu0
    %v1166 = vadd.f32 0.0, %v1165
    %v1167 = vpop.f32.mrb[0].mxu0
    %v1168 = vpop.f32.mrb[0].mxu0
    %1169 = vdwg.mxu0
    %1170 = vmatprep.subr.bf16.mxu0 %v228
    %1171 = vmatpush1.bf16.msra.mxu0 %v227
    %1172 = vmatprep.subr.bf16.mxu0 %v232
    %1173 = vmatpush1.bf16.msra.mxu0 %v231
    %1174 = vmatprep.subr.bf16.mxu0 %v236
    %1175 = vmatpush1.bf16.msra.mxu0 %v235
    %1176 = vmatprep.subr.bf16.mxu0 %v240
    %1177 = vmatpush1.bf16.msra.mxu0 %v239
    %1178 = vmatprep.subr.bf16.mxu0 %v244
    %1179 = vmatpush1.bf16.msra.mxu0 %v243
    %1180 = vmatprep.subr.bf16.mxu0 %v248
    %1181 = vmatpush1.bf16.msra.mxu0 %v247
    %1182 = vmatprep.subr.bf16.mxu0 %v252
    %1183 = vmatpush1.bf16.msra.mxu0 %v251
    %1184 = vmatprep.subr.bf16.mxu0 %v256
    %1185 = vmatpush1.bf16.msra.mxu0 %v255
    %1186 = vmatprep.subr.bf16.mxu0 0
    %1187 = vmatpush1.bf16.msra.mxu0 0
    %1188 = vmatprep.subr.bf16.mxu0 0
    %1189 = vmatpush1.bf16.msra.mxu0 0
    %1190 = vmatprep.subr.bf16.mxu0 0
    %1191 = vmatpush1.bf16.msra.mxu0 0
    %1192 = vmatprep.subr.bf16.mxu0 0
    %1193 = vmatpush1.bf16.msra.mxu0 0
    %1194 = vmatprep.subr.bf16.mxu0 0
    %1195 = vmatpush1.bf16.msra.mxu0 0
    %1196 = vmatprep.subr.bf16.mxu0 0
    %1197 = vmatpush1.bf16.msra.mxu0 0
    %1198 = vmatprep.subr.bf16.mxu0 0
    %1199 = vmatpush1.bf16.msra.mxu0 0
    %1200 = vmatprep.subr.bf16.mxu0 0
    %1201 = vmatpush1.bf16.msra.mxu0 0
    %1202 = vmatprep.mubr.bf16.mxu0 0
    %1203 = vmatmul.mubr.bf16.gmra.mrb[0].mxu0 %v1128
    %v1204 = vpop.f32.mrb[0].mxu0
    %v1205 = vadd.f32 0.0, %v1204
    %v1206 = vpop.f32.mrb[0].mxu0
    %v1207 = vadd.f32 0.0, %v1206
    %v1208 = vpop.f32.mrb[0].mxu0
    %v1209 = vpop.f32.mrb[0].mxu0
    %1210 = vdwg.mxu0
    %v1211 = vadd.f32 %v1124, %v1164
    %v1212 = vadd.f32 %v1125, %v1166
    %v1213 = vadd.f32 %v1126, %v1205
    %v1214 = vadd.f32 %v1127, %v1207
    %v1215 = vmul.f32 %v1211, 0.5
    %v1216 = vmul.f32 %v1212, 0.5
    %v1217 = vmul.f32 %v1213, 0.5
    %v1218 = vtanh.pop %v1215
    %v1219 = vtanh.pop %v1216
    %v1220 = vtanh.pop %v1217
    %v1221 = vmul.f32 %v1218, 0.5
    %v1222 = vmul.f32 %v1219, 0.5
    %v1223 = vmul.f32 %v1220, 0.5
    %v1224 = vadd.f32 %v1221, 0.5
    %v1225 = vadd.f32 %v1222, 0.5
    %v1226 = vadd.f32 %v1223, 0.5
    %v1227 = vtanh.pop %v1214
    %v1228 = vmul.f32 %v1225, %v1110
    %v1229 = vmul.f32 %v1224, %v1227
    %v1230 = vadd.f32 %v1228, %v1229
    %v1231 = vtanh.pop %v1230
    %v1232 = vmul.f32 %v1226, %v1231
    %v1233 = vld [vmem:[%s4] sm:$0x1]
    %v1235 = vlaneseq
    %v1236 = vshrl.u32 %v1235, 7
    %v1237 = vsub.s32 0, %v1236
    %v1238 = vrot.slane %v1233, %v1237
    %v1240 = vmul.f32 %v1232, %v1238
    %1241 = vadd.xlane.f32.xlu0 %v1240
    %v1242 = vpop.xlane.xlu0 %1241
    %s1243 = sld [smem:[#allocation2]]
    %v1244 = vstv %s1243
    %v1245 = vadd.f32 %v1242, %v1244
    %vm1246 = vcmask 7168
    %1247 = vst.msk [vmem:[%s6] sm:$0xff] %vm1246, %v1245
    // Predicated region
    $region30: #{tpu_custom_call.1} parent=1 // pred_check
      _
    $region31: #{tpu_custom_call.1} parent=1 // pred_check_branch
      %1249 = sbr.rel (0) target = $region33
    $region32: #{tpu_custom_call.1} parent=1 // pred_region
      _
    $region33: #{tpu_custom_call.1} parent=1 // pred_fallthru
      _
    // Predicated region
    $region34: #{tpu_custom_call.1} parent=1 // pred_check
      _
    $region35: #{tpu_custom_call.1} parent=1 // pred_check_branch
      %1251 = sbr.rel (0) target = $region37
    $region36: #{tpu_custom_call.1} parent=1 // pred_region
      _
    $region37: #{tpu_custom_call.1} parent=1 // pred_fallthru
      _
    %1252 = vsyncpa [#allocation4], 1

</llo_original>
